<compile_context>
chip_gen: v7x
topology: tpu7x:2x2x1
jax: 0.10.0
libtpu: 0.0.40
codegen_flags: <defaults>
</compile_context>

<pallas_src>
import functools

import jax
import jax.numpy as jnp
from jax.experimental import pallas as pl
from jax.experimental.pallas import tpu as pltpu


def gaussian_fitting_kernel(x_ref, w_in_ref, b_in_ref, ln_w_ref, ln_b_ref,
                            w_out_ref, b_out_ref, o_ref, *scratch,
                            num_heads, head_dim, sigma, ln_eps,
                            matmul_dtype, exp_dtype, eu, q_tile,
                            acc_in_output):
    if acc_in_output:
        xn_ref, xnp_ref = scratch
        acc_ref = o_ref                       # accumulate straight into the output block
    else:
        acc_ref, xn_ref, xnp_ref = scratch

    q = pl.program_id(1)
    h = pl.program_id(2)
    S = x_ref.shape[0]
    n_pack = head_dim // eu                   # rows of the packed key-feature scratch

    def mm(a, b):
        return jnp.dot(a.astype(matmul_dtype), b.astype(matmul_dtype),
                       preferred_element_type=jnp.float32)

    # ---- in_project (this head's output columns) for ALL S rows (keys) ----
    x = x_ref[...].astype(jnp.float32)                         # (S, D)
    xh = mm(x, w_in_ref[...]) + b_in_ref[...]                  # (S, hd) f32

    # ---- per-head LayerNorm (f32 on the VPU) ----
    mu = jnp.mean(xh, axis=-1, keepdims=True)
    var = jnp.mean((xh - mu) ** 2, axis=-1, keepdims=True)
    xn = (xh - mu) * jax.lax.rsqrt(var + ln_eps)
    xn = xn * ln_w_ref[...] + ln_b_ref[...]                    # (S, hd)
    xn_ref[...] = xn

    # ---- lane-pack the key features: packed row i holds eu distinct feature
    #      rows of xn^T laid end-to-end on the 128-lane axis (eu*S lanes per
    #      EUP exp).  Built with contiguous slices only. ----
    xnT = xn.T                                                 # (hd, S)
    for u in range(eu):                                        # static unroll
        xnp_ref[:, u * S:(u + 1) * S] = xnT[u * n_pack:(u + 1) * n_pack, :]

    # ---- this query tile (loop-invariant broadcast hoisted) ----
    q0 = pl.multiple_of(q * q_tile, q_tile)
    xq = xn_ref[pl.ds(q0, q_tile), :]                          # (Tq, hd)
    xq3 = xq[:, :, None]                                       # (Tq, hd, 1)

    neg_inv_two_sigma_sq = -1.0 / (2.0 * sigma * sigma)

    # ---- Gaussian pairwise-sum scores:
    #   G[i, j] = sum_{e1, e2} exp(-(xn_q[i, e1] - xn[j, e2])^2 / (2 sigma^2))
    # Loop over packed rows (each covers eu key-features x S keys on lanes).
    def gauss_body(i, g):
        keys = xnp_ref[pl.ds(i, 1), :]                         # (1, eu*S)
        d = xq3 - keys[None, :, :]                             # (Tq, hd, eu*S)
        z = (d * d) * neg_inv_two_sigma_sq
        e = jnp.exp(z.astype(exp_dtype)).astype(jnp.float32)   # bf16 EUP on v6e/v7x
        return g + jnp.sum(e, axis=1)                          # reduce e1 -> (Tq, eu*S)

    g_packed = jax.lax.fori_loop(
        0, n_pack, gauss_body, jnp.zeros((q_tile, eu * S), jnp.float32),
        unroll=(n_pack <= 4))

    # collapse the eu packed feature groups back onto the S keys
    g = g_packed[:, 0:S]
    for u in range(1, eu):                                     # static unroll
        g = g + g_packed[:, u * S:(u + 1) * S]                 # (Tq, S)

    # ---- scale + softmax over keys (reciprocal on the EUP slot) ----
    logits = g * (1.0 / head_dim)
    m = jnp.max(logits, axis=-1, keepdims=True)
    p = jnp.exp(logits - m)
    attn = p * pl.reciprocal(jnp.sum(p, axis=-1, keepdims=True), approx=True)
    # TODO(synk): attn_dropout (p=0.05) omitted -> eval/inference semantics.

    # ---- attention output for this head and query tile ----
    head_out = mm(attn, xn)                                    # (Tq, hd)

    @pl.when(h == 0)
    def _():
        acc_ref[...] = jnp.zeros_like(acc_ref)

    # concat(heads) @ W_out  ==  sum_h head_out_h @ W_out[h*hd:(h+1)*hd, :]
    acc_ref[...] += mm(head_out, w_out_ref[...]).astype(acc_ref.dtype)

    @pl.when(h == num_heads - 1)
    def _():
        o_ref[...] = (acc_ref[...].astype(jnp.float32)
                      + b_out_ref[...]).astype(o_ref.dtype)


def _pick_eu(head_dim, seq_len):
    """Smallest divisor of head_dim such that eu*S >= 128 lanes (capped)."""
    target = max(1, -(-128 // seq_len))
    if target >= head_dim:
        return head_dim
    for e in range(target, head_dim + 1):
        if head_dim % e == 0:
            return e
    return head_dim


def _pick_query_tile(seq_len, target=128):
    """Query tile: a multiple of 8 dividing S (or S itself)."""
    if seq_len <= target:
        return seq_len
    for t in range(target, 7, -1):
        if seq_len % t == 0 and t % 8 == 0:
            return t
    return seq_len


def gaussian_fitting(inputs, params, *, num_heads, sigma=1.0, ln_eps=1e-5,
                     matmul_dtype=jnp.float32, exp_dtype=jnp.float32,
                     q_tile=None):
    B, S, D = inputs.shape
    head_dim = D // num_heads
    assert head_dim * num_heads == D, "model_dim must be divisible by num_heads"

    if q_tile is None:
        q_tile = _pick_query_tile(S)
    assert S % q_tile == 0
    eu = _pick_eu(head_dim, S)

    # ---- generation-aware VMEM budget (fixed byte accounting) ----
    def _vmem_estimate(eu_, q_tile_):
        per_step_f32_words = (
            2 * S * D                            # x block, double-buffered
            + 2 * q_tile_ * D                    # output block, double-buffered
            + 2 * 2 * D * head_dim               # per-head W_in + W_out, double-buffered
            + 2 * S * head_dim                   # xn scratch + xn^T temporary
            + head_dim * S                       # packed key-feature scratch
            + q_tile_ * D                        # out-project accumulator
            + 3 * q_tile_ * head_dim * eu_ * S   # Gaussian exp temporaries (+headroom)
            + 4 * q_tile_ * S                    # logits / softmax temporaries
        )
        return 4 * per_step_f32_words + (2 << 20)

    try:
        vmem_physical = pltpu.get_tpu_info().vmem_capacity_bytes
    except Exception:
        vmem_physical = 64 << 20                 # conservative (v7x per-TC)
    vmem_budget = int(vmem_physical) * 3 // 4

    # Shrink the lane-packing factor / query tile if the estimate overshoots.
    while _vmem_estimate(eu, q_tile) > vmem_budget and eu > 1:
        eu -= 1
        while head_dim % eu:
            eu -= 1
    while (_vmem_estimate(eu, q_tile) > vmem_budget and q_tile > 8
           and q_tile % 2 == 0 and (q_tile // 2) % 8 == 0):
        q_tile //= 2
    # TODO(synk): key-axis tiling + online softmax for very large S.

    n_q = S // q_tile
    vmem_limit = int(min(vmem_budget, max(_vmem_estimate(eu, q_tile), 32 << 20)))

    # Host-side layout plumbing: per-head weight slices on a leading axis so
    # BlockSpec index maps stream one head's weights per step.
    w_in_r = params["w_in"].reshape(D, num_heads, head_dim).transpose(1, 0, 2)
    b_in_r = params["b_in"].reshape(num_heads, 1, head_dim)
    w_out_r = params["w_out"].reshape(num_heads, head_dim, D)

    acc_in_output = (inputs.dtype == jnp.float32)

    kernel = functools.partial(
        gaussian_fitting_kernel,
        num_heads=num_heads, head_dim=head_dim, sigma=sigma, ln_eps=ln_eps,
        matmul_dtype=matmul_dtype, exp_dtype=exp_dtype, eu=eu, q_tile=q_tile,
        acc_in_output=acc_in_output)

    scratch_shapes = []
    if not acc_in_output:
        scratch_shapes.append(pltpu.VMEM((q_tile, D), jnp.float32))   # f32 accumulator
    scratch_shapes += [
        pltpu.VMEM((S, head_dim), jnp.float32),                       # xn (all keys)
        pltpu.VMEM((head_dim // eu, eu * S), jnp.float32),            # lane-packed xn^T
    ]

    return pl.pallas_call(
        kernel,
        out_shape=jax.ShapeDtypeStruct((B, S, D), inputs.dtype),
        grid_spec=pltpu.PrefetchScalarGridSpec(
            num_scalar_prefetch=0,
            grid=(B, n_q, num_heads),             # heads = reduction, last
            in_specs=[
                pl.BlockSpec((None, S, D), lambda b, q, h: (b, 0, 0)),          # x (full seq)
                pl.BlockSpec((None, D, head_dim), lambda b, q, h: (h, 0, 0)),   # W_in[:, head]
                pl.BlockSpec((None, 1, head_dim), lambda b, q, h: (h, 0, 0)),   # b_in[head]
                pl.BlockSpec((1, head_dim), lambda b, q, h: (0, 0)),            # ln weight
                pl.BlockSpec((1, head_dim), lambda b, q, h: (0, 0)),            # ln bias
                pl.BlockSpec((None, head_dim, D), lambda b, q, h: (h, 0, 0)),   # W_out[head, :]
                pl.BlockSpec((1, D), lambda b, q, h: (0, 0)),                   # b_out
            ],
            out_specs=pl.BlockSpec((None, q_tile, D), lambda b, q, h: (b, q, 0)),
            scratch_shapes=scratch_shapes,
        ),
        compiler_params=pltpu.CompilerParams(
            dimension_semantics=("parallel", "parallel", "arbitrary"),
            vmem_limit_bytes=vmem_limit),
    )(inputs, w_in_r, b_in_r, params["ln_w"], params["ln_b"],
      w_out_r, params["b_out"])


def reference(inputs, params, *, num_heads, sigma=1.0, ln_eps=1e-5):
    """Pure-JAX reference mirroring the PyTorch forward (eval mode)."""
    B, S, D = inputs.shape
    hd = D // num_heads
    x = inputs @ params["w_in"] + params["b_in"]                       # (B,S,D)
    x = x.reshape(B, S, num_heads, hd).transpose(0, 2, 1, 3)           # (B,H,S,hd)
    mu = x.mean(-1, keepdims=True)
    var = ((x - mu) ** 2).mean(-1, keepdims=True)
    xn = (x - mu) / jnp.sqrt(var + ln_eps) * params["ln_w"][0] + params["ln_b"][0]
    xg = xn.reshape(B * num_heads, S, hd)
    d = xg[:, :, None, :, None] - xg[:, None, :, None, :]              # (BH,S,S,hd,hd)
    g = jnp.exp(-(d ** 2) / (2.0 * sigma ** 2)).sum((-1, -2)) / hd     # (BH,S,S)
    attn = jax.nn.softmax(g, axis=-1).reshape(B, num_heads, S, S)
    out = jnp.einsum("bhij,bhjd->bhid", attn, xn)                      # (B,H,S,hd)
    out = out.transpose(0, 2, 1, 3).reshape(B, S, D)
    return out @ params["w_out"] + params["b_out"]


if __name__ == "__main__":
    B, S, model_dim, num_heads, sigma = 2, 8, 32, 4, 1.0
    head_dim = model_dim // num_heads

    key = jax.random.PRNGKey(0)
    k = jax.random.split(key, 6)
    inputs = jax.random.normal(k[0], (B, S, model_dim), dtype=jnp.float32)
    params = {
        "w_in":  0.1 * jax.random.normal(k[1], (model_dim, model_dim), jnp.float32),
        "b_in":  0.1 * jax.random.normal(k[2], (1, model_dim), jnp.float32),
        "ln_w":  jnp.ones((1, head_dim), jnp.float32),
        "ln_b":  jnp.zeros((1, head_dim), jnp.float32),
        "w_out": 0.1 * jax.random.normal(k[3], (model_dim, model_dim), jnp.float32),
        "b_out": 0.1 * jax.random.normal(k[4], (1, model_dim), jnp.float32),
    }

    ref = reference(inputs, params, num_heads=num_heads, sigma=sigma)

    # ---- default f32 path: strict check vs the f32 reference ----
    out = gaussian_fitting(inputs, params, num_heads=num_heads, sigma=sigma)
    out = jax.block_until_ready(out)
    assert out.shape == (B, S, model_dim)
    # 2e-3 tolerance: approx EUP reciprocal in the softmax adds ~1e-4-level
    # relative error vs the exact-divide f32 reference.
    max_err = float(jnp.max(jnp.abs(out - ref)))
    assert max_err < 2e-3, f"mismatch vs reference: {max_err}"

    # ---- reduced-precision path (v6e/v7x: bf16 EUP exp + bf16 MXU matmuls);
    #      loose gate only — the strict correctness check is the f32 run. ----
    out_lp = gaussian_fitting(inputs, params, num_heads=num_heads, sigma=sigma,
                              matmul_dtype=jnp.bfloat16, exp_dtype=jnp.bfloat16)
    out_lp = jax.block_until_ready(out_lp)
    assert bool(jnp.all(jnp.isfinite(out_lp)))
    max_err_lp = float(jnp.max(jnp.abs(out_lp - ref)))
    assert max_err_lp < 1.5e-1, f"bf16 path off the rails: {max_err_lp}"

    print("KERNEL_OK")
</pallas_src>

<mosaic_0001>
module attributes {stable_mosaic.version = 11 : i64} {
  func.func @gaussian_fitting_kernel(%arg0: i32, %arg1: i32, %arg2: i32, %arg3: memref<1x8x32xf32, #tpu.memory_space<vmem>>, %arg4: memref<1x32x8xf32, #tpu.memory_space<vmem>>, %arg5: memref<1x1x8xf32, #tpu.memory_space<vmem>>, %arg6: memref<1x8xf32, #tpu.memory_space<vmem>>, %arg7: memref<1x8xf32, #tpu.memory_space<vmem>>, %arg8: memref<1x8x32xf32, #tpu.memory_space<vmem>>, %arg9: memref<1x32xf32, #tpu.memory_space<vmem>>, %arg10: memref<1x8x32xf32, #tpu.memory_space<vmem>>, %arg11: memref<8x8xf32, #tpu.memory_space<vmem>>, %arg12: memref<1x64xf32, #tpu.memory_space<vmem>>) attributes {dimension_semantics = [#tpu.dimension_semantics<parallel>, #tpu.dimension_semantics<parallel>, #tpu.dimension_semantics<arbitrary>], iteration_bounds = array<i64: 2, 1, 4>, scalar_prefetch = 0 : i64, scratch_operands = 2 : i64, tpu.core_type = #tpu.core_type<tc>, window_params = [{transform_indices = @transform_0, window_bounds = array<i64: 1, 8, 32>}, {transform_indices = @transform_1, window_bounds = array<i64: 1, 32, 8>}, {transform_indices = @transform_2, window_bounds = array<i64: 1, 1, 8>}, {pipeline_mode = #tpu.pipeline_mode<synchronous>, transform_indices = @transform_3, window_bounds = array<i64: 1, 8>}, {pipeline_mode = #tpu.pipeline_mode<synchronous>, transform_indices = @transform_4, window_bounds = array<i64: 1, 8>}, {transform_indices = @transform_5, window_bounds = array<i64: 1, 8, 32>}, {pipeline_mode = #tpu.pipeline_mode<synchronous>, transform_indices = @transform_6, window_bounds = array<i64: 1, 32>}, {transform_indices = @transform_7, window_bounds = array<i64: 1, 8, 32>}]} {
    %c0 = arith.constant 0 : index
    %c0_0 = arith.constant 0 : index
    %c0_1 = arith.constant 0 : index
    %0 = vector.load %arg3[%c0, %c0_0, %c0_1] : memref<1x8x32xf32, #tpu.memory_space<vmem>>, vector<1x8x32xf32>
    %1 = vector.shape_cast %0 : vector<1x8x32xf32> to vector<8x32xf32>
    %c0_2 = arith.constant 0 : index
    %c0_3 = arith.constant 0 : index
    %c0_4 = arith.constant 0 : index
    %2 = vector.load %arg4[%c0_2, %c0_3, %c0_4] : memref<1x32x8xf32, #tpu.memory_space<vmem>>, vector<1x32x8xf32>
    %3 = vector.shape_cast %2 : vector<1x32x8xf32> to vector<32x8xf32>
    %cst = arith.constant dense<0.000000e+00> : vector<8x8xf32>
    %4 = tpu.matmul %1, %3, %cst {dimension_numbers = #tpu.dot_dimension_numbers<[1], [0], [0], [1], [0, 0, 1, 1], [], []>} : vector<8x32xf32>, vector<32x8xf32>, vector<8x8xf32> -> vector<8x8xf32>
    %c0_5 = arith.constant 0 : index
    %c0_6 = arith.constant 0 : index
    %c0_7 = arith.constant 0 : index
    %5 = vector.load %arg5[%c0_5, %c0_6, %c0_7] : memref<1x1x8xf32, #tpu.memory_space<vmem>>, vector<1x1x8xf32>
    %6 = vector.shape_cast %5 : vector<1x1x8xf32> to vector<1x8xf32>
    %7 = vector.broadcast %6 : vector<1x8xf32> to vector<8x8xf32>
    %8 = arith.addf %4, %7 : vector<8x8xf32>
    %cst_8 = arith.constant dense<0.000000e+00> : vector<8xf32>
    %9 = vector.multi_reduction <add>, %8, %cst_8 [1] : vector<8x8xf32> to vector<8xf32>
    %10 = vector.shape_cast %9 : vector<8xf32> to vector<8x1xf32>
    %cst_9 = arith.constant 8.000000e+00 : f32
    %11 = vector.broadcast %cst_9 : f32 to vector<8x1xf32>
    %12 = arith.divf %10, %11 : vector<8x1xf32>
    %13 = vector.broadcast %12 : vector<8x1xf32> to vector<8x8xf32>
    %14 = arith.subf %8, %13 : vector<8x8xf32>
    %15 = arith.mulf %14, %14 : vector<8x8xf32>
    %cst_10 = arith.constant dense<0.000000e+00> : vector<8xf32>
    %16 = vector.multi_reduction <add>, %15, %cst_10 [1] : vector<8x8xf32> to vector<8xf32>
    %17 = vector.shape_cast %16 : vector<8xf32> to vector<8x1xf32>
    %cst_11 = arith.constant 8.000000e+00 : f32
    %18 = vector.broadcast %cst_11 : f32 to vector<8x1xf32>
    %19 = arith.divf %17, %18 : vector<8x1xf32>
    %20 = vector.broadcast %12 : vector<8x1xf32> to vector<8x8xf32>
    %21 = arith.subf %8, %20 : vector<8x8xf32>
    %cst_12 = arith.constant 9.99999974E-6 : f32
    %22 = vector.broadcast %cst_12 : f32 to vector<8x1xf32>
    %23 = arith.addf %19, %22 : vector<8x1xf32>
    %24 = math.rsqrt %23 : vector<8x1xf32>
    %25 = vector.broadcast %24 : vector<8x1xf32> to vector<8x8xf32>
    %26 = arith.mulf %21, %25 : vector<8x8xf32>
    %c0_13 = arith.constant 0 : index
    %c0_14 = arith.constant 0 : index
    %27 = vector.load %arg6[%c0_13, %c0_14] : memref<1x8xf32, #tpu.memory_space<vmem>>, vector<1x8xf32>
    %28 = vector.broadcast %27 : vector<1x8xf32> to vector<8x8xf32>
    %29 = arith.mulf %26, %28 : vector<8x8xf32>
    %c0_15 = arith.constant 0 : index
    %c0_16 = arith.constant 0 : index
    %30 = vector.load %arg7[%c0_15, %c0_16] : memref<1x8xf32, #tpu.memory_space<vmem>>, vector<1x8xf32>
    %31 = vector.broadcast %30 : vector<1x8xf32> to vector<8x8xf32>
    %32 = arith.addf %29, %31 : vector<8x8xf32>
    %c0_17 = arith.constant 0 : index
    %c0_18 = arith.constant 0 : index
    %33 = vector.load %arg11[%c0_17, %c0_18] : memref<8x8xf32, #tpu.memory_space<vmem>>, vector<8x8xf32>
    tpu.vector_store %arg11[%c0_17, %c0_18], %32 {strides = array<i32>} : memref<8x8xf32, #tpu.memory_space<vmem>>, vector<8x8xf32>,
    %34 = tpu.transpose %32, [1, 0] : vector<8x8xf32> -> vector<8x8xf32>
    %35 = vector.extract_strided_slice %34 {offsets = [0, 0], sizes = [1, 8], strides = [1, 1]} : vector<8x8xf32> to vector<1x8xf32>
    %c0_19 = arith.constant 0 : index
    %c0_20 = arith.constant 0 : index
    %36 = vector.load %arg12[%c0_19, %c0_20] : memref<1x64xf32, #tpu.memory_space<vmem>>, vector<1x8xf32>
    tpu.vector_store %arg12[%c0_19, %c0_20], %35 {strides = array<i32>} : memref<1x64xf32, #tpu.memory_space<vmem>>, vector<1x8xf32>,
    %37 = vector.extract_strided_slice %34 {offsets = [1, 0], sizes = [1, 8], strides = [1, 1]} : vector<8x8xf32> to vector<1x8xf32>
    %c0_21 = arith.constant 0 : index
    %c8 = arith.constant 8 : index
    %38 = vector.load %arg12[%c0_21, %c8] : memref<1x64xf32, #tpu.memory_space<vmem>>, vector<1x8xf32>
    tpu.vector_store %arg12[%c0_21, %c8], %37 {strides = array<i32>} : memref<1x64xf32, #tpu.memory_space<vmem>>, vector<1x8xf32>,
    %39 = vector.extract_strided_slice %34 {offsets = [2, 0], sizes = [1, 8], strides = [1, 1]} : vector<8x8xf32> to vector<1x8xf32>
    %c0_22 = arith.constant 0 : index
    %c16 = arith.constant 16 : index
    %40 = vector.load %arg12[%c0_22, %c16] : memref<1x64xf32, #tpu.memory_space<vmem>>, vector<1x8xf32>
    tpu.vector_store %arg12[%c0_22, %c16], %39 {strides = array<i32>} : memref<1x64xf32, #tpu.memory_space<vmem>>, vector<1x8xf32>,
    %41 = vector.extract_strided_slice %34 {offsets = [3, 0], sizes = [1, 8], strides = [1, 1]} : vector<8x8xf32> to vector<1x8xf32>
    %c0_23 = arith.constant 0 : index
    %c24 = arith.constant 24 : index
    %42 = vector.load %arg12[%c0_23, %c24] : memref<1x64xf32, #tpu.memory_space<vmem>>, vector<1x8xf32>
    tpu.vector_store %arg12[%c0_23, %c24], %41 {strides = array<i32>} : memref<1x64xf32, #tpu.memory_space<vmem>>, vector<1x8xf32>,
    %43 = vector.extract_strided_slice %34 {offsets = [4, 0], sizes = [1, 8], strides = [1, 1]} : vector<8x8xf32> to vector<1x8xf32>
    %c0_24 = arith.constant 0 : index
    %c32 = arith.constant 32 : index
    %44 = vector.load %arg12[%c0_24, %c32] : memref<1x64xf32, #tpu.memory_space<vmem>>, vector<1x8xf32>
    tpu.vector_store %arg12[%c0_24, %c32], %43 {strides = array<i32>} : memref<1x64xf32, #tpu.memory_space<vmem>>, vector<1x8xf32>,
    %45 = vector.extract_strided_slice %34 {offsets = [5, 0], sizes = [1, 8], strides = [1, 1]} : vector<8x8xf32> to vector<1x8xf32>
    %c0_25 = arith.constant 0 : index
    %c40 = arith.constant 40 : index
    %46 = vector.load %arg12[%c0_25, %c40] : memref<1x64xf32, #tpu.memory_space<vmem>>, vector<1x8xf32>
    tpu.vector_store %arg12[%c0_25, %c40], %45 {strides = array<i32>} : memref<1x64xf32, #tpu.memory_space<vmem>>, vector<1x8xf32>,
    %47 = vector.extract_strided_slice %34 {offsets = [6, 0], sizes = [1, 8], strides = [1, 1]} : vector<8x8xf32> to vector<1x8xf32>
    %c0_26 = arith.constant 0 : index
    %c48 = arith.constant 48 : index
    %48 = vector.load %arg12[%c0_26, %c48] : memref<1x64xf32, #tpu.memory_space<vmem>>, vector<1x8xf32>
    tpu.vector_store %arg12[%c0_26, %c48], %47 {strides = array<i32>} : memref<1x64xf32, #tpu.memory_space<vmem>>, vector<1x8xf32>,
    %49 = vector.extract_strided_slice %34 {offsets = [7, 0], sizes = [1, 8], strides = [1, 1]} : vector<8x8xf32> to vector<1x8xf32>
    %c0_27 = arith.constant 0 : index
    %c56 = arith.constant 56 : index
    %50 = vector.load %arg12[%c0_27, %c56] : memref<1x64xf32, #tpu.memory_space<vmem>>, vector<1x8xf32>
    tpu.vector_store %arg12[%c0_27, %c56], %49 {strides = array<i32>} : memref<1x64xf32, #tpu.memory_space<vmem>>, vector<1x8xf32>,
    %c8_i32 = arith.constant 8 : i32
    %51 = arith.muli %arg1, %c8_i32 : i32
    %52 = tpu.assume_multiple %51, 8 : i32
    %53 = arith.index_cast %52 : i32 to index
    %c0_28 = arith.constant 0 : index
    %54 = vector.load %arg11[%53, %c0_28] : memref<8x8xf32, #tpu.memory_space<vmem>>, vector<8x8xf32>
    %55 = vector.shape_cast %54 : vector<8x8xf32> to vector<8x8x1xf32>
    %cst_29 = arith.constant 0.000000e+00 : f32
    %56 = vector.broadcast %cst_29 : f32 to vector<8x64xf32>
    %c0_i32 = arith.constant 0 : i32
    %57 = arith.index_cast %c0_i32 : i32 to index
    %c0_30 = arith.constant 0 : index
    %58 = vector.load %arg12[%57, %c0_30] : memref<1x64xf32, #tpu.memory_space<vmem>>, vector<1x64xf32>
    %59 = vector.shape_cast %58 : vector<1x64xf32> to vector<1x1x64xf32>
    %60 = vector.broadcast %55 : vector<8x8x1xf32> to vector<8x8x64xf32>
    %61 = vector.broadcast %59 : vector<1x1x64xf32> to vector<8x8x64xf32>
    %62 = arith.subf %60, %61 : vector<8x8x64xf32>
    %63 = arith.mulf %62, %62 : vector<8x8x64xf32>
    %cst_31 = arith.constant -5.000000e-01 : f32
    %64 = vector.broadcast %cst_31 : f32 to vector<8x8x64xf32>
    %65 = arith.mulf %63, %64 : vector<8x8x64xf32>
    %66 = math.exp %65 : vector<8x8x64xf32>
    %cst_32 = arith.constant dense<0.000000e+00> : vector<8x64xf32>
    %67 = vector.multi_reduction <add>, %66, %cst_32 [1] : vector<8x8x64xf32> to vector<8x64xf32>
    %68 = arith.addf %56, %67 : vector<8x64xf32>
    %c1_i32 = arith.constant 1 : i32
    %69 = vector.extract_strided_slice %68 {offsets = [0, 0], sizes = [8, 8], strides = [1, 1]} : vector<8x64xf32> to vector<8x8xf32>
    %70 = vector.extract_strided_slice %68 {offsets = [0, 8], sizes = [8, 8], strides = [1, 1]} : vector<8x64xf32> to vector<8x8xf32>
    %71 = arith.addf %69, %70 : vector<8x8xf32>
    %72 = vector.extract_strided_slice %68 {offsets = [0, 16], sizes = [8, 8], strides = [1, 1]} : vector<8x64xf32> to vector<8x8xf32>
    %73 = arith.addf %71, %72 : vector<8x8xf32>
    %74 = vector.extract_strided_slice %68 {offsets = [0, 24], sizes = [8, 8], strides = [1, 1]} : vector<8x64xf32> to vector<8x8xf32>
    %75 = arith.addf %73, %74 : vector<8x8xf32>
    %76 = vector.extract_strided_slice %68 {offsets = [0, 32], sizes = [8, 8], strides = [1, 1]} : vector<8x64xf32> to vector<8x8xf32>
    %77 = arith.addf %75, %76 : vector<8x8xf32>
    %78 = vector.extract_strided_slice %68 {offsets = [0, 40], sizes = [8, 8], strides = [1, 1]} : vector<8x64xf32> to vector<8x8xf32>
    %79 = arith.addf %77, %78 : vector<8x8xf32>
    %80 = vector.extract_strided_slice %68 {offsets = [0, 48], sizes = [8, 8], strides = [1, 1]} : vector<8x64xf32> to vector<8x8xf32>
    %81 = arith.addf %79, %80 : vector<8x8xf32>
    %82 = vector.extract_strided_slice %68 {offsets = [0, 56], sizes = [8, 8], strides = [1, 1]} : vector<8x64xf32> to vector<8x8xf32>
    %83 = arith.addf %81, %82 : vector<8x8xf32>
    %cst_33 = arith.constant 1.250000e-01 : f32
    %84 = vector.broadcast %cst_33 : f32 to vector<8x8xf32>
    %85 = arith.mulf %83, %84 : vector<8x8xf32>
    %cst_34 = arith.constant dense<0xFF800000> : vector<8xf32>
    %86 = vector.multi_reduction <maximumf>, %85, %cst_34 [1] : vector<8x8xf32> to vector<8xf32>
    %87 = vector.shape_cast %86 : vector<8xf32> to vector<8x1xf32>
    %88 = vector.broadcast %87 : vector<8x1xf32> to vector<8x8xf32>
    %89 = arith.subf %85, %88 : vector<8x8xf32>
    %90 = math.exp %89 : vector<8x8xf32>
    %cst_35 = arith.constant dense<0.000000e+00> : vector<8xf32>
    %91 = vector.multi_reduction <add>, %90, %cst_35 [1] : vector<8x8xf32> to vector<8xf32>
    %92 = vector.shape_cast %91 : vector<8xf32> to vector<8x1xf32>
    %93 = tpu.reciprocal %92 {approx = true} : vector<8x1xf32> -> vector<8x1xf32>
    %94 = vector.broadcast %93 : vector<8x1xf32> to vector<8x8xf32>
    %95 = arith.mulf %90, %94 : vector<8x8xf32>
    %cst_36 = arith.constant dense<0.000000e+00> : vector<8x8xf32>
    %96 = tpu.matmul %95, %32, %cst_36 {dimension_numbers = #tpu.dot_dimension_numbers<[1], [0], [0], [1], [0, 0, 1, 1], [], []>} : vector<8x8xf32>, vector<8x8xf32>, vector<8x8xf32> -> vector<8x8xf32>
    %c0_i32_37 = arith.constant 0 : i32
    %97 = arith.cmpi eq, %arg2, %c0_i32_37 : i32
    %98 = arith.extui %97 : i1 to i32
    %c0_i32_38 = arith.constant 0 : i32
    %99 = arith.cmpi ne, %98, %c0_i32_38 : i32
    scf.if %99 {
      %cst_50 = arith.constant 0.000000e+00 : f32
      %112 = vector.broadcast %cst_50 : f32 to vector<8x32xf32>
      %c0_51 = arith.constant 0 : index
      %c0_52 = arith.constant 0 : index
      %c0_53 = arith.constant 0 : index
      %113 = vector.load %arg10[%c0_51, %c0_52, %c0_53] : memref<1x8x32xf32, #tpu.memory_space<vmem>>, vector<1x8x32xf32>
      %114 = vector.shape_cast %113 : vector<1x8x32xf32> to vector<8x32xf32>
      %115 = vector.shape_cast %112 : vector<8x32xf32> to vector<1x8x32xf32>
      tpu.vector_store %arg10[%c0_51, %c0_52, %c0_53], %115 {strides = array<i32>} : memref<1x8x32xf32, #tpu.memory_space<vmem>>, vector<1x8x32xf32>,
    } else {
    }
    %c0_39 = arith.constant 0 : index
    %c0_40 = arith.constant 0 : index
    %c0_41 = arith.constant 0 : index
    %100 = vector.load %arg10[%c0_39, %c0_40, %c0_41] : memref<1x8x32xf32, #tpu.memory_space<vmem>>, vector<1x8x32xf32>
    %101 = vector.shape_cast %100 : vector<1x8x32xf32> to vector<8x32xf32>
    %c0_42 = arith.constant 0 : index
    %c0_43 = arith.constant 0 : index
    %c0_44 = arith.constant 0 : index
    %102 = vector.load %arg8[%c0_42, %c0_43, %c0_44] : memref<1x8x32xf32, #tpu.memory_space<vmem>>, vector<1x8x32xf32>
    %103 = vector.shape_cast %102 : vector<1x8x32xf32> to vector<8x32xf32>
    %cst_45 = arith.constant dense<0.000000e+00> : vector<8x32xf32>
    %104 = tpu.matmul %96, %103, %cst_45 {dimension_numbers = #tpu.dot_dimension_numbers<[1], [0], [0], [1], [0, 0, 1, 1], [], []>} : vector<8x8xf32>, vector<8x32xf32>, vector<8x32xf32> -> vector<8x32xf32>
    %105 = arith.addf %101, %104 : vector<8x32xf32>
    %c0_46 = arith.constant 0 : index
    %c0_47 = arith.constant 0 : index
    %c0_48 = arith.constant 0 : index
    %106 = vector.load %arg10[%c0_46, %c0_47, %c0_48] : memref<1x8x32xf32, #tpu.memory_space<vmem>>, vector<1x8x32xf32>
    %107 = vector.shape_cast %106 : vector<1x8x32xf32> to vector<8x32xf32>
    %108 = vector.shape_cast %105 : vector<8x32xf32> to vector<1x8x32xf32>
    tpu.vector_store %arg10[%c0_46, %c0_47, %c0_48], %108 {strides = array<i32>} : memref<1x8x32xf32, #tpu.memory_space<vmem>>, vector<1x8x32xf32>,
    %c3_i32 = arith.constant 3 : i32
    %109 = arith.cmpi eq, %arg2, %c3_i32 : i32
    %110 = arith.extui %109 : i1 to i32
    %c0_i32_49 = arith.constant 0 : i32
    %111 = arith.cmpi ne, %110, %c0_i32_49 : i32
    scf.if %111 {
      %c0_50 = arith.constant 0 : index
      %c0_51 = arith.constant 0 : index
      %c0_52 = arith.constant 0 : index
      %112 = vector.load %arg10[%c0_50, %c0_51, %c0_52] : memref<1x8x32xf32, #tpu.memory_space<vmem>>, vector<1x8x32xf32>
      %113 = vector.shape_cast %112 : vector<1x8x32xf32> to vector<8x32xf32>
      %c0_53 = arith.constant 0 : index
      %c0_54 = arith.constant 0 : index
      %114 = vector.load %arg9[%c0_53, %c0_54] : memref<1x32xf32, #tpu.memory_space<vmem>>, vector<1x32xf32>
      %115 = vector.broadcast %114 : vector<1x32xf32> to vector<8x32xf32>
      %116 = arith.addf %113, %115 : vector<8x32xf32>
      %c0_55 = arith.constant 0 : index
      %c0_56 = arith.constant 0 : index
      %c0_57 = arith.constant 0 : index
      %117 = vector.load %arg10[%c0_55, %c0_56, %c0_57] : memref<1x8x32xf32, #tpu.memory_space<vmem>>, vector<1x8x32xf32>
      %118 = vector.shape_cast %117 : vector<1x8x32xf32> to vector<8x32xf32>
      %119 = vector.shape_cast %116 : vector<8x32xf32> to vector<1x8x32xf32>
      tpu.vector_store %arg10[%c0_55, %c0_56, %c0_57], %119 {strides = array<i32>} : memref<1x8x32xf32, #tpu.memory_space<vmem>>, vector<1x8x32xf32>,
    } else {
    }
    return
  }
  func.func @transform_0(%arg0: i32, %arg1: i32, %arg2: i32) -> (i32, i32, i32) {
    %c0_i32 = arith.constant 0 : i32
    %c0_i32_0 = arith.constant 0 : i32
    %c0_i32_1 = arith.constant 0 : i32
    return %arg0, %c0_i32, %c0_i32_0 : i32, i32, i32
  }
  func.func @transform_1(%arg0: i32, %arg1: i32, %arg2: i32) -> (i32, i32, i32) {
    %c0_i32 = arith.constant 0 : i32
    %c0_i32_0 = arith.constant 0 : i32
    %c0_i32_1 = arith.constant 0 : i32
    return %arg2, %c0_i32, %c0_i32_0 : i32, i32, i32
  }
  func.func @transform_2(%arg0: i32, %arg1: i32, %arg2: i32) -> (i32, i32, i32) {
    %c0_i32 = arith.constant 0 : i32
    %c0_i32_0 = arith.constant 0 : i32
    %c0_i32_1 = arith.constant 0 : i32
    return %arg2, %c0_i32, %c0_i32_0 : i32, i32, i32
  }
  func.func @transform_3(%arg0: i32, %arg1: i32, %arg2: i32) -> (i32, i32) {
    %c0_i32 = arith.constant 0 : i32
    %c0_i32_0 = arith.constant 0 : i32
    %c0_i32_1 = arith.constant 0 : i32
    return %c0_i32, %c0_i32_0 : i32, i32
  }
  func.func @transform_4(%arg0: i32, %arg1: i32, %arg2: i32) -> (i32, i32) {
    %c0_i32 = arith.constant 0 : i32
    %c0_i32_0 = arith.constant 0 : i32
    %c0_i32_1 = arith.constant 0 : i32
    return %c0_i32, %c0_i32_0 : i32, i32
  }
  func.func @transform_5(%arg0: i32, %arg1: i32, %arg2: i32) -> (i32, i32, i32) {
    %c0_i32 = arith.constant 0 : i32
    %c0_i32_0 = arith.constant 0 : i32
    %c0_i32_1 = arith.constant 0 : i32
    return %arg2, %c0_i32, %c0_i32_0 : i32, i32, i32
  }
  func.func @transform_6(%arg0: i32, %arg1: i32, %arg2: i32) -> (i32, i32) {
    %c0_i32 = arith.constant 0 : i32
    %c0_i32_0 = arith.constant 0 : i32
    %c0_i32_1 = arith.constant 0 : i32
    return %c0_i32, %c0_i32_0 : i32, i32
  }
  func.func @transform_7(%arg0: i32, %arg1: i32, %arg2: i32) -> (i32, i32, i32) {
    %c0_i32 = arith.constant 0 : i32
    %c0_i32_0 = arith.constant 0 : i32
    return %arg0, %arg1, %c0_i32 : i32, i32, i32
  }
}

</mosaic_0001>

<llo_original>
// kernel: tpu_custom_call.1
$region0: #{tpu_custom_call.1}
  #allocation0 [shape = 'u32[]', space=smem, size = 0x4, offset = 0x4, fixed_abs, tag = 'smem constant byte address 0x4 - core index']
  #allocation1 [shape = 'u32[144,128]{1,0:T(1,128)}', space=vmem, size = 0x12000, scoped, tag = 'internal scratch']
  #allocation2 [shape = 'f32[8,8]{1,0:T(8,128)}', space=vmem, size = 0x1000, scoped, tag = 'scratch operand']
  #allocation3 [shape = 'f32[1,64]{1,0:T(1,128)}', space=vmem, size = 0x200, scoped, tag = 'scratch operand']
  %s0 = inlined_call_operand.vmem [shape: f32[2,8,32], index: 0, kind: input, shape index: {}]
  %s1 = inlined_call_operand.vmem [shape: f32[4,32,8], index: 1, kind: input, shape index: {}]
  %s2 = inlined_call_operand.vmem [shape: f32[4,1,8], index: 2, kind: input, shape index: {}]
  %s3 = inlined_call_operand.vmem [shape: f32[1,8], index: 3, kind: input, shape index: {}]
  %s4 = inlined_call_operand.vmem [shape: f32[1,8], index: 4, kind: input, shape index: {}]
  %s5 = inlined_call_operand.vmem [shape: f32[4,8,32], index: 5, kind: input, shape index: {}]
  %s6 = inlined_call_operand.vmem [shape: f32[1,32], index: 6, kind: input, shape index: {}]
  %s7 = inlined_call_operand.hbm [shape: f32[2,8,32], index: 7, kind: output, shape index: {}]
  %s8 = sld [smem:[#allocation0]]
  $region69: #{tpu_custom_call.1} parent=0
    _
  %s10 = ssub.s32 1, %s8
  %s11 = scalar_select 0, %s10, %s8
  $region1: #{tpu_custom_call.1} parent=0
    #allocation4 [shape = 'u8[8192]{0}', space=vmem, size = 0x2000, scoped, tag = 'output window, operand 0']
    #allocation5 [shape = 's32[2]{0}', space=sflag, size = 0x8, scoped, tag = 'scoped memory for tpu_custom_call.1']
    %12 = vsyncpa [#allocation5], 0
    %s13 = scalar_lea.sflag [#allocation5], 1
    %14 = vsyncpa %s13, 0
    loop: start=0, step=1, limit=10
    $region2: #{tpu_custom_call.1} parent=1 // loop_pre_header
      _
    $region3: #{tpu_custom_call.1} parent=1 // loop_header
      %s16 = sphi 0, %s20
      %p17 = scmp.ge.s32.totalorder %s16, 10
      %s23 = sphi 0, %s42
      %s24 = sphi 0, %s38
      %s25 = sphi 0, %s34
      %s26 = sphi 0, %s23
      %s27 = sphi 0, %s24
      %s28 = sphi 0, %s25
      %s29 = sphi 0, %s26
      %s30 = sphi 0, %s27
      %s31 = sphi 0, %s28
      %s45 = sphi 0, %s47
      %s48 = sphi 0, %s45
      %s49 = sphi 0, %s48
      %s65 = sphi 0, %s49
      %s71 = sphi 0, %s73
      %s74 = sphi 0, %s71
      %s75 = sphi 0, %s74
      %s91 = sphi 0, %s75
      %s97 = sphi 0, %s99
      %s100 = sphi 0, %s97
      %s101 = sphi 0, %s100
      %s117 = sphi 0, %s101
      %s121 = sphi 0, %s121
      %s123 = sphi 0, %s121
      %s124 = sphi 0, %s123
      %s138 = sphi 0, %s124
      %s142 = sphi 0, %s142
      %s144 = sphi 0, %s142
      %s145 = sphi 0, %s144
      %s159 = sphi 0, %s145
      %s165 = sphi 0, %s167
      %s168 = sphi 0, %s165
      %s169 = sphi 0, %s168
      %s185 = sphi 0, %s169
      %s189 = sphi 0, %s189
      %s191 = sphi 0, %s189
      %s192 = sphi 0, %s191
      %s206 = sphi 0, %s192
      %s214 = sphi 0, %s216
      %s217 = sphi 0, %s214
      %s218 = sphi 0, %s217
      %s234 = sphi 0, %s218
    $region4: #{tpu_custom_call.1} parent=1 // loop_header_branch
      %19 = sbr.rel (%p17) target = $region8
    $region5: #{tpu_custom_call.1} parent=1 // loop_body
      %s21 = ssub.s32 %s16, 1
      %s22 = ssub.s32 %s16, 2
      %s32 = sadd.s32 1, %s25
      %p33 = scmp.ge.s32.totalorder %s32, 4
      %s34 = scalar_select %p33, 0, %s32
      %s35 = sadd.s32 1, %s24
      %s36 = scalar_select %p33, %s35, %s24
      %p37 = scmp.ge.s32.totalorder %s36, 1
      %s38 = scalar_select %p37, 0, %s36
      %s39 = sadd.s32 1, %s23
      %s40 = scalar_select %p37, %s39, %s23
      %p41 = scmp.ge.s32.totalorder %s40, 2
      %s42 = scalar_select %p41, 0, %s40
      %s43 = ssub.s32 %s23, %s42
      %p44 = scmp.eq.s32.totalorder %s43, 0
      %s46 = sadd.s32 %s45, 1
      %s47 = scalar_select %p44, %s45, %s46
      %p50 = pneg %p44
      %p51 = scmp.eq.s32.totalorder %s16, 7
      %p52 = por %p50, %p51
      %p53 = scmp.ne.s32.totalorder %s45, %s48
      %p54 = scmp.eq.s32.totalorder %s16, 0
      %p55 = por %p53, %p54
      %p56 = scmp.ne.s32.totalorder %s45, %s48
      %p57 = scmp.eq.s32.totalorder %s21, 7
      %p58 = por %p56, %p57
      %p59 = scmp.ne.s32.totalorder %s48, %s49
      %p60 = scmp.eq.s32.totalorder %s21, 0
      %p61 = por %p59, %p60
      %p62 = scmp.ne.s32.totalorder %s48, %s49
      %p63 = scmp.eq.s32.totalorder %s22, 7
      %p64 = por %p62, %p63
      %p66 = scmp.ne.s32.totalorder %s49, %s65
      %p67 = scmp.eq.s32.totalorder %s22, 0
      %p68 = por %p66, %p67
      %s69 = ssub.s32 %s25, %s34
      %p70 = scmp.eq.s32.totalorder %s69, 0
      %s72 = sadd.s32 %s71, 1
      %s73 = scalar_select %p70, %s71, %s72
      %p76 = pneg %p70
      %p77 = scmp.eq.s32.totalorder %s16, 7
      %p78 = por %p76, %p77
      %p79 = scmp.ne.s32.totalorder %s71, %s74
      %p80 = scmp.eq.s32.totalorder %s16, 0
      %p81 = por %p79, %p80
      %p82 = scmp.ne.s32.totalorder %s71, %s74
      %p83 = scmp.eq.s32.totalorder %s21, 7
      %p84 = por %p82, %p83
      %p85 = scmp.ne.s32.totalorder %s74, %s75
      %p86 = scmp.eq.s32.totalorder %s21, 0
      %p87 = por %p85, %p86
      %p88 = scmp.ne.s32.totalorder %s74, %s75
      %p89 = scmp.eq.s32.totalorder %s22, 7
      %p90 = por %p88, %p89
      %p92 = scmp.ne.s32.totalorder %s75, %s91
      %p93 = scmp.eq.s32.totalorder %s22, 0
      %p94 = por %p92, %p93
      %s95 = ssub.s32 %s25, %s34
      %p96 = scmp.eq.s32.totalorder %s95, 0
      %s98 = sadd.s32 %s97, 1
      %s99 = scalar_select %p96, %s97, %s98
      %p102 = pneg %p96
      %p103 = scmp.eq.s32.totalorder %s16, 7
      %p104 = por %p102, %p103
      %p105 = scmp.ne.s32.totalorder %s97, %s100
      %p106 = scmp.eq.s32.totalorder %s16, 0
      %p107 = por %p105, %p106
      %p108 = scmp.ne.s32.totalorder %s97, %s100
      %p109 = scmp.eq.s32.totalorder %s21, 7
      %p110 = por %p108, %p109
      %p111 = scmp.ne.s32.totalorder %s100, %s101
      %p112 = scmp.eq.s32.totalorder %s21, 0
      %p113 = por %p111, %p112
      %p114 = scmp.ne.s32.totalorder %s100, %s101
      %p115 = scmp.eq.s32.totalorder %s22, 7
      %p116 = por %p114, %p115
      %p118 = scmp.ne.s32.totalorder %s101, %s117
      %p119 = scmp.eq.s32.totalorder %s22, 0
      %p120 = por %p118, %p119
      %s122 = sadd.s32 %s121, 1
      %p125 = scmp.eq.s32.totalorder %s16, 7
      %p126 = scmp.ne.s32.totalorder %s121, %s123
      %p127 = scmp.eq.s32.totalorder %s16, 0
      %p128 = por %p126, %p127
      %p129 = scmp.ne.s32.totalorder %s121, %s123
      %p130 = scmp.eq.s32.totalorder %s21, 7
      %p131 = por %p129, %p130
      %p132 = scmp.ne.s32.totalorder %s123, %s124
      %p133 = scmp.eq.s32.totalorder %s21, 0
      %p134 = por %p132, %p133
      %p135 = scmp.ne.s32.totalorder %s123, %s124
      %p136 = scmp.eq.s32.totalorder %s22, 7
      %p137 = por %p135, %p136
      %p139 = scmp.ne.s32.totalorder %s124, %s138
      %p140 = scmp.eq.s32.totalorder %s22, 0
      %p141 = por %p139, %p140
      %s143 = sadd.s32 %s142, 1
      %p146 = scmp.eq.s32.totalorder %s16, 7
      %p147 = scmp.ne.s32.totalorder %s142, %s144
      %p148 = scmp.eq.s32.totalorder %s16, 0
      %p149 = por %p147, %p148
      %p150 = scmp.ne.s32.totalorder %s142, %s144
      %p151 = scmp.eq.s32.totalorder %s21, 7
      %p152 = por %p150, %p151
      %p153 = scmp.ne.s32.totalorder %s144, %s145
      %p154 = scmp.eq.s32.totalorder %s21, 0
      %p155 = por %p153, %p154
      %p156 = scmp.ne.s32.totalorder %s144, %s145
      %p157 = scmp.eq.s32.totalorder %s22, 7
      %p158 = por %p156, %p157
      %p160 = scmp.ne.s32.totalorder %s145, %s159
      %p161 = scmp.eq.s32.totalorder %s22, 0
      %p162 = por %p160, %p161
      %s163 = ssub.s32 %s25, %s34
      %p164 = scmp.eq.s32.totalorder %s163, 0
      %s166 = sadd.s32 %s165, 1
      %s167 = scalar_select %p164, %s165, %s166
      %p170 = pneg %p164
      %p171 = scmp.eq.s32.totalorder %s16, 7
      %p172 = por %p170, %p171
      %p173 = scmp.ne.s32.totalorder %s165, %s168
      %p174 = scmp.eq.s32.totalorder %s16, 0
      %p175 = por %p173, %p174
      %p176 = scmp.ne.s32.totalorder %s165, %s168
      %p177 = scmp.eq.s32.totalorder %s21, 7
      %p178 = por %p176, %p177
      %p179 = scmp.ne.s32.totalorder %s168, %s169
      %p180 = scmp.eq.s32.totalorder %s21, 0
      %p181 = por %p179, %p180
      %p182 = scmp.ne.s32.totalorder %s168, %s169
      %p183 = scmp.eq.s32.totalorder %s22, 7
      %p184 = por %p182, %p183
      %p186 = scmp.ne.s32.totalorder %s169, %s185
      %p187 = scmp.eq.s32.totalorder %s22, 0
      %p188 = por %p186, %p187
      %s190 = sadd.s32 %s189, 1
      %p193 = scmp.eq.s32.totalorder %s16, 7
      %p194 = scmp.ne.s32.totalorder %s189, %s191
      %p195 = scmp.eq.s32.totalorder %s16, 0
      %p196 = por %p194, %p195
      %p197 = scmp.ne.s32.totalorder %s189, %s191
      %p198 = scmp.eq.s32.totalorder %s21, 7
      %p199 = por %p197, %p198
      %p200 = scmp.ne.s32.totalorder %s191, %s192
      %p201 = scmp.eq.s32.totalorder %s21, 0
      %p202 = por %p200, %p201
      %p203 = scmp.ne.s32.totalorder %s191, %s192
      %p204 = scmp.eq.s32.totalorder %s22, 7
      %p205 = por %p203, %p204
      %p207 = scmp.ne.s32.totalorder %s192, %s206
      %p208 = scmp.eq.s32.totalorder %s22, 0
      %p209 = por %p207, %p208
      %s210 = ssub.s32 %s23, %s42
      %s211 = ssub.s32 %s24, %s38
      %s212 = sor.u32 %s210, %s211
      %p213 = scmp.eq.s32.totalorder %s212, 0
      %s215 = sadd.s32 %s214, 1
      %s216 = scalar_select %p213, %s214, %s215
      %p219 = pneg %p213
      %p220 = scmp.eq.s32.totalorder %s16, 7
      %p221 = por %p219, %p220
      %p222 = scmp.ne.s32.totalorder %s214, %s217
      %p223 = scmp.eq.s32.totalorder %s16, 0
      %p224 = por %p222, %p223
      %p225 = scmp.ne.s32.totalorder %s214, %s217
      %p226 = scmp.eq.s32.totalorder %s21, 7
      %p227 = por %p225, %p226
      %p228 = scmp.ne.s32.totalorder %s217, %s218
      %p229 = scmp.eq.s32.totalorder %s21, 0
      %p230 = por %p228, %p229
      %p231 = scmp.ne.s32.totalorder %s217, %s218
      %p232 = scmp.eq.s32.totalorder %s22, 7
      %p233 = por %p231, %p232
      %p235 = scmp.ne.s32.totalorder %s218, %s234
      %p236 = scmp.eq.s32.totalorder %s22, 0
      %p237 = por %p235, %p236
      %p238 = scmp.le.s32.totalorder 1, %s16
      %p239 = scmp.lt.s32.totalorder %s16, 9
      %p240 = pnand %p238, %p239
      %p241 = pneg %p240
      // Predicated region
      $region9: #{tpu_custom_call.1} parent=5 // pred_check
        _
      $region10: #{tpu_custom_call.1} parent=5 // pred_check_branch
        %243 = sbr.rel (%p240) target = $region12
      $region11: #{tpu_custom_call.1} parent=5 // pred_region
        %s244 = ssub.s32 %s16, 1
        // Predicated region
        $region13: #{tpu_custom_call.1} parent=11 // pred_check
          %p245 = pneg %p134
        $region14: #{tpu_custom_call.1} parent=11 // pred_check_branch
          %247 = sbr.rel (%p245) target = $region16
        $region15: #{tpu_custom_call.1} parent=11 // pred_region
          _
        $region16: #{tpu_custom_call.1} parent=11 // pred_fallthru
          _
        // Predicated region
        $region17: #{tpu_custom_call.1} parent=11 // pred_check
          %p248 = pneg %p155
        $region18: #{tpu_custom_call.1} parent=11 // pred_check_branch
          %250 = sbr.rel (%p248) target = $region20
        $region19: #{tpu_custom_call.1} parent=11 // pred_region
          _
        $region20: #{tpu_custom_call.1} parent=11 // pred_fallthru
          _
        // Predicated region
        $region21: #{tpu_custom_call.1} parent=11 // pred_check
          %p251 = pneg %p202
        $region22: #{tpu_custom_call.1} parent=11 // pred_check_branch
          %253 = sbr.rel (%p251) target = $region24
        $region23: #{tpu_custom_call.1} parent=11 // pred_region
          _
        $region24: #{tpu_custom_call.1} parent=11 // pred_fallthru
          _
      $region12: #{tpu_custom_call.1} parent=5 // pred_fallthru
        _
      %p254 = scmp.lt.s32.totalorder %s16, 8
      // Predicated region
      $region25: #{tpu_custom_call.1} parent=5 // pred_check
        %p255 = pneg %p254
      $region26: #{tpu_custom_call.1} parent=5 // pred_check_branch
        %257 = sbr.rel (%p255) target = $region28
      $region27: #{tpu_custom_call.1} parent=5 // pred_region
        // Predicated region
        $region29: #{tpu_custom_call.1} parent=27 // pred_check
          %p258 = pneg %p55
        $region30: #{tpu_custom_call.1} parent=27 // pred_check_branch
          %260 = sbr.rel (%p258) target = $region32
        $region31: #{tpu_custom_call.1} parent=27 // pred_region
          %p261 = scmp.lt.s32.totalorder %s23, 1
          %s262 = scalar_select %p261, %s23, 1
          %s263 = smul.addr %s262, 8
          %s264 = scalar_lea.vmem %s0, %s263
        $region32: #{tpu_custom_call.1} parent=27 // pred_fallthru
          _
        // Predicated region
        $region33: #{tpu_custom_call.1} parent=27 // pred_check
          %p265 = pneg %p81
        $region34: #{tpu_custom_call.1} parent=27 // pred_check_branch
          %267 = sbr.rel (%p265) target = $region36
        $region35: #{tpu_custom_call.1} parent=27 // pred_region
          %p268 = scmp.lt.s32.totalorder %s25, 3
          %s269 = scalar_select %p268, %s25, 3
          %s270 = smul.addr %s269, 4
          %s271 = smul.addr %s270, 8
          %s272 = scalar_lea.vmem %s1, %s271
        $region36: #{tpu_custom_call.1} parent=27 // pred_fallthru
          _
        // Predicated region
        $region37: #{tpu_custom_call.1} parent=27 // pred_check
          %p273 = pneg %p107
        $region38: #{tpu_custom_call.1} parent=27 // pred_check_branch
          %275 = sbr.rel (%p273) target = $region40
        $region39: #{tpu_custom_call.1} parent=27 // pred_region
          %p276 = scmp.lt.s32.totalorder %s25, 3
          %s277 = scalar_select %p276, %s25, 3
          %s278 = scalar_lea.vmem %s2, %s277
        $region40: #{tpu_custom_call.1} parent=27 // pred_fallthru
          _
        // Predicated region
        $region41: #{tpu_custom_call.1} parent=27 // pred_check
          %p279 = pneg %p175
        $region42: #{tpu_custom_call.1} parent=27 // pred_check_branch
          %281 = sbr.rel (%p279) target = $region44
        $region43: #{tpu_custom_call.1} parent=27 // pred_region
          %p282 = scmp.lt.s32.totalorder %s25, 3
          %s283 = scalar_select %p282, %s25, 3
          %s284 = smul.addr %s283, 8
          %s285 = scalar_lea.vmem %s5, %s284
        $region44: #{tpu_custom_call.1} parent=27 // pred_fallthru
          _
      $region28: #{tpu_custom_call.1} parent=5 // pred_fallthru
        _
      %p286 = scmp.le.s32.totalorder 1, %s16
      %p287 = scmp.lt.s32.totalorder %s16, 9
      %p288 = pnand %p286, %p287
      %p289 = pneg %p288
      // Predicated region
      $region45: #{tpu_custom_call.1} parent=5 // pred_check
        _
      $region46: #{tpu_custom_call.1} parent=5 // pred_check_branch
        %291 = sbr.rel (%p288) target = $region48
      $region47: #{tpu_custom_call.1} parent=5 // pred_region
        %s292 = ssub.s32 %s16, 1
        %p293 = scmp.lt.s32.totalorder %s26, 1
        %s294 = scalar_select %p293, %s26, 1
        %s295 = smul.addr %s294, 8
        %s296 = scalar_lea.vmem %s0, %s295
        %p297 = pneg %p61
        %p298 = pneg %p58
        %p299 = scmp.lt.s32.totalorder %s28, 3
        %s300 = scalar_select %p299, %s28, 3
        %s301 = smul.addr %s300, 4
        %s302 = smul.addr %s301, 8
        %s303 = scalar_lea.vmem %s1, %s302
        %p304 = pneg %p87
        %p305 = pneg %p84
        %p306 = scmp.lt.s32.totalorder %s28, 3
        %s307 = scalar_select %p306, %s28, 3
        %s308 = scalar_lea.vmem %s2, %s307
        %p309 = pneg %p113
        %p310 = pneg %p110
        %p311 = pneg %p134
        %p312 = pneg %p131
        %p313 = pneg %p155
        %p314 = pneg %p152
        %p315 = scmp.lt.s32.totalorder %s28, 3
        %s316 = scalar_select %p315, %s28, 3
        %s317 = smul.addr %s316, 8
        %s318 = scalar_lea.vmem %s5, %s317
        %p319 = pneg %p181
        %p320 = pneg %p178
        %p321 = pneg %p202
        %p322 = pneg %p199
        %p323 = pneg %p230
        %p324 = pneg %p227
        %s325 = sand.u32 %s217, 1
        %s326 = scalar_lea.sflag [#allocation5], %s325
        %s327 = sand.u32 %s217, 1
        %s328 = smul.addr %s327, 8
        %s329 = scalar_lea.vmem [#allocation4], %s328
        %p330 = scmp.lt.s32.totalorder %s26, 1
        %s331 = scalar_select %p330, %s26, 1
        %s332 = smul.addr %s331, 8
        %s333 = scalar_lea.vmem %s0, %s332
        %p334 = scmp.lt.s32.totalorder %s28, 3
        %s335 = scalar_select %p334, %s28, 3
        %s336 = smul.addr %s335, 4
        %s337 = smul.addr %s336, 8
        %s338 = scalar_lea.vmem %s1, %s337
        %p339 = scmp.lt.s32.totalorder %s28, 3
        %s340 = scalar_select %p339, %s28, 3
        %s341 = scalar_lea.vmem %s2, %s340
        %p342 = scmp.lt.s32.totalorder %s28, 3
        %s343 = scalar_select %p342, %s28, 3
        %s344 = smul.addr %s343, 8
        %s345 = scalar_lea.vmem %s5, %s344
        %v346 = vld [vmem:[%s333] sm:$0xff]
        %v347 = vld [vmem:[%s338] sm:$0xff]
        %v348 = vld [vmem:[%s338 + $0x8] sm:$0xff]
        %v349 = vld [vmem:[%s338 + $0x10] sm:$0xff]
        %v350 = vld [vmem:[%s338 + $0x18] sm:$0xff]
        %v351 = vld [vmem:[%s341] sm:$0x1]
        %v353 = vlaneseq
        %v354 = vshrl.u32 %v353, 7
        %v355 = vsub.s32 0, %v354
        %v356 = vrot.slane %v351, %v355
        %vm358 = vcmask 261120
        %v360 = vsel %vm358, %v346, 0
        %362 = vmatprep.subr.mxu0 0.0
        %363 = vmatpush1.msra.mxu0 %v347
        %364 = vmatprep.subr.mxu0 0.0
        %365 = vmatpush1.msra.mxu0 %v348
        %366 = vmatprep.subr.mxu0 0.0
        %367 = vmatpush1.msra.mxu0 %v349
        %368 = vmatprep.subr.mxu0 0.0
        %369 = vmatpush1.msra.mxu0 %v350
        %370 = vmatprep.subr.mxu0 0.0
        %371 = vmatpush1.msra.mxu0 0.0
        %372 = vmatprep.subr.mxu0 0.0
        %373 = vmatpush1.msra.mxu0 0.0
        %374 = vmatprep.subr.mxu0 0.0
        %375 = vmatpush1.msra.mxu0 0.0
        %376 = vmatprep.subr.mxu0 0.0
        %377 = vmatpush1.msra.mxu0 0.0
        %378 = vmatprep.subr.mxu0 0.0
        %379 = vmatpush1.msra.mxu0 0.0
        %380 = vmatprep.subr.mxu0 0.0
        %381 = vmatpush1.msra.mxu0 0.0
        %382 = vmatprep.subr.mxu0 0.0
        %383 = vmatpush1.msra.mxu0 0.0
        %384 = vmatprep.subr.mxu0 0.0
        %385 = vmatpush1.msra.mxu0 0.0
        %386 = vmatprep.subr.mxu0 0.0
        %387 = vmatpush1.msra.mxu0 0.0
        %388 = vmatprep.subr.mxu0 0.0
        %389 = vmatpush1.msra.mxu0 0.0
        %390 = vmatprep.subr.mxu0 0.0
        %391 = vmatpush1.msra.mxu0 0.0
        %392 = vmatprep.subr.mxu0 0.0
        %393 = vmatpush1.msra.mxu0 0.0
        %394 = vmatprep.subr.mxu0 0.0
        %395 = vmatpush1.msra.mxu0 0.0
        %396 = vmatprep.subr.mxu0 0.0
        %397 = vmatpush1.msra.mxu0 0.0
        %398 = vmatprep.subr.mxu0 0.0
        %399 = vmatpush1.msra.mxu0 0.0
        %400 = vmatprep.subr.mxu0 0.0
        %401 = vmatpush1.msra.mxu0 0.0
        %402 = vmatprep.subr.mxu0 0.0
        %403 = vmatpush1.msra.mxu0 0.0
        %404 = vmatprep.subr.mxu0 0.0
        %405 = vmatpush1.msra.mxu0 0.0
        %406 = vmatprep.subr.mxu0 0.0
        %407 = vmatpush1.msra.mxu0 0.0
        %408 = vmatprep.subr.mxu0 0.0
        %409 = vmatpush1.msra.mxu0 0.0
        %410 = vmatprep.subr.mxu0 0.0
        %411 = vmatpush1.msra.mxu0 0.0
        %412 = vmatprep.subr.mxu0 0.0
        %413 = vmatpush1.msra.mxu0 0.0
        %414 = vmatprep.subr.mxu0 0.0
        %415 = vmatpush1.msra.mxu0 0.0
        %416 = vmatprep.subr.mxu0 0.0
        %417 = vmatpush1.msra.mxu0 0.0
        %418 = vmatprep.subr.mxu0 0.0
        %419 = vmatpush1.msra.mxu0 0.0
        %420 = vmatprep.subr.mxu0 0.0
        %421 = vmatpush1.msra.mxu0 0.0
        %422 = vmatprep.subr.mxu0 0.0
        %423 = vmatpush1.msra.mxu0 0.0
        %424 = vmatprep.subr.mxu0 0.0
        %425 = vmatpush1.msra.mxu0 0.0
        %426 = vmatprep.mubr.f32.mxu0 0.0
        %427 = vmatmul.mubr.f32.gmra.mrb[0].mxu0 %v360
        %v428 = vpop.f32.mrb[0].mxu0
        %v429 = vadd.f32 %v356, %v428
        %v430 = vpop.f32.mrb[0].mxu0
        %431 = vdwg.mxu0
        %vm432 = vcmask 64512
        %v433 = vsel %vm432, %v429, 0.0
        %434 = vadd.xlane.f32.xlu0 %v433
        %v435 = vpop.xlane.xlu0 %434
        %v436 = vrcp.pop 8.0
        %v437 = vmul.f32 %v435, %v436
        %v438 = vsub.f32 %v429, %v437
        %v439 = vmul.f32 %v438, %v438
        %v440 = vsel %vm432, %v439, 0.0
        %441 = vadd.xlane.f32.xlu0 %v440
        %v442 = vpop.xlane.xlu0 %441
        %v443 = vmul.f32 %v442, %v436
        %v444 = vadd.f32 %v443, 1e-05
        %v445 = vrsqrt.pop %v444
        %v446 = vmul.f32 %v438, %v445
        %v447 = vld [vmem:[%s3] sm:$0x1]
        %v449 = vlaneseq
        %v450 = vshrl.u32 %v449, 7
        %v451 = vsub.s32 0, %v450
        %v452 = vrot.slane %v447, %v451
        %v454 = vmul.f32 %v446, %v452
        %v455 = vld [vmem:[%s4] sm:$0x1]
        %v457 = vlaneseq
        %v458 = vshrl.u32 %v457, 7
        %v459 = vsub.s32 0, %v458
        %v460 = vrot.slane %v455, %v459
        %v462 = vadd.f32 %v454, %v460
        %463 = vst.msk [vmem:[#allocation2] sm:$0xff] %vm432, %v462
        %464 = vxpose.xlu0.b32.start [1/16] %v462, 128
        %465 = vxpose.xlu0.b32.cont [2/16] 0.0, 128
        %466 = vxpose.xlu0.b32.cont [3/16] 0.0, 128
        %467 = vxpose.xlu0.b32.cont [4/16] 0.0, 128
        %468 = vxpose.xlu0.b32.cont [5/16] 0.0, 128
        %469 = vxpose.xlu0.b32.cont [6/16] 0.0, 128
        %470 = vxpose.xlu0.b32.cont [7/16] 0.0, 128
        %471 = vxpose.xlu0.b32.cont [8/16] 0.0, 128
        %472 = vxpose.xlu0.b32.cont [9/16] 0.0, 128
        %473 = vxpose.xlu0.b32.cont [10/16] 0.0, 128
        %474 = vxpose.xlu0.b32.cont [11/16] 0.0, 128
        %475 = vxpose.xlu0.b32.cont [12/16] 0.0, 128
        %476 = vxpose.xlu0.b32.cont [13/16] 0.0, 128
        %477 = vxpose.xlu0.b32.cont [14/16] 0.0, 128
        %478 = vxpose.xlu0.b32.cont [15/16] 0.0, 128
        %479 = vxpose.xlu0.b32.end [16/16] 0.0, 128
        %v480 = vpop.trf.xlu0
        %v481 = vpop.trf.xlu0
        %v482 = vpop.trf.xlu0
        %v483 = vpop.trf.xlu0
        %v484 = vpop.trf.xlu0
        %v485 = vpop.trf.xlu0
        %v486 = vpop.trf.xlu0
        %v487 = vpop.trf.xlu0
        %v488 = vpop.trf.xlu0
        %v489 = vpop.trf.xlu0
        %v490 = vpop.trf.xlu0
        %v491 = vpop.trf.xlu0
        %v492 = vpop.trf.xlu0
        %v493 = vpop.trf.xlu0
        %v494 = vpop.trf.xlu0
        %v495 = vpop.trf.xlu0
        %vm496 = vcmask 57344
        %497 = vst.msk [vmem:[#allocation3] sm:$0x1] %vm496, %v480
        %499 = vrot.lane.b32.xlu0 %v480, 8
        %v500 = vpop.permute.xlu0 %499
        %vm502 = vcmask 123969
        %503 = vst.msk [vmem:[#allocation3 - $0x1] sm:$0x2] %vm502, %v500
        %504 = vrot.lane.b32.xlu0 %v480, 16
        %v505 = vpop.permute.xlu0 %504
        %vm507 = vcmask 190594
        %508 = vst.msk [vmem:[#allocation3 - $0x2] sm:$0x4] %vm507, %v505
        %509 = vrot.lane.b32.xlu0 %v480, 24
        %v510 = vpop.permute.xlu0 %509
        %vm512 = vcmask 257219
        %513 = vst.msk [vmem:[#allocation3 - $0x3] sm:$0x8] %vm512, %v510
        %514 = vrot.lane.b32.xlu0 %v480, 32
        %v515 = vpop.permute.xlu0 %514
        %vm517 = vcmask 323844
        %518 = vst.msk [vmem:[#allocation3 - $0x4] sm:$0x10] %vm517, %v515
        %519 = vrot.lane.b32.xlu0 %v480, 40
        %v520 = vpop.permute.xlu0 %519
        %vm522 = vcmask 390469
        %523 = vst.msk [vmem:[#allocation3 - $0x5] sm:$0x20] %vm522, %v520
        %524 = vrot.lane.b32.xlu0 %v480, 48
        %v525 = vpop.permute.xlu0 %524
        %vm527 = vcmask 457094
        %528 = vst.msk [vmem:[#allocation3 - $0x6] sm:$0x40] %vm527, %v525
        %529 = vrot.lane.b32.xlu0 %v480, 56
        %v530 = vpop.permute.xlu0 %529
        %vm532 = vcmask 523719
        %533 = vst.msk [vmem:[#allocation3 - $0x7] sm:$0x80] %vm532, %v530
        %s534 = smul.u32 %s27, 8
        %s535 = scalar_lea.vmem [#allocation2], %s534
        %v536 = vld [vmem:[%s535] sm:$0xff]
        %v537 = vlaneseq
        %v538 = vshrl.u32 %v537, 7
        %v539 = vsub.s32 0, %v538
        %v540 = vrot.slane %v536, %v539
        %542 = vbcast.lane.b32.xlu0 %v540, 256
        %v543 = vpop.permute.xlu0 %542
        %v544 = vlaneseq
        %v545 = vshrl.u32 %v544, 7
        %v546 = vsub.s32 1, %v545
        %v547 = vrot.slane %v536, %v546
        %549 = vbcast.lane.b32.xlu0 %v547, 256
        %v550 = vpop.permute.xlu0 %549
        %v551 = vlaneseq
        %v552 = vshrl.u32 %v551, 7
        %v553 = vsub.s32 2, %v552
        %v554 = vrot.slane %v536, %v553
        %556 = vbcast.lane.b32.xlu0 %v554, 256
        %v557 = vpop.permute.xlu0 %556
        %v558 = vlaneseq
        %v559 = vshrl.u32 %v558, 7
        %v560 = vsub.s32 3, %v559
        %v561 = vrot.slane %v536, %v560
        %563 = vbcast.lane.b32.xlu0 %v561, 256
        %v564 = vpop.permute.xlu0 %563
        %v565 = vlaneseq
        %v566 = vshrl.u32 %v565, 7
        %v567 = vsub.s32 4, %v566
        %v568 = vrot.slane %v536, %v567
        %570 = vbcast.lane.b32.xlu0 %v568, 256
        %v571 = vpop.permute.xlu0 %570
        %v572 = vlaneseq
        %v573 = vshrl.u32 %v572, 7
        %v574 = vsub.s32 5, %v573
        %v575 = vrot.slane %v536, %v574
        %577 = vbcast.lane.b32.xlu0 %v575, 256
        %v578 = vpop.permute.xlu0 %577
        %v579 = vlaneseq
        %v580 = vshrl.u32 %v579, 7
        %v581 = vsub.s32 6, %v580
        %v582 = vrot.slane %v536, %v581
        %584 = vbcast.lane.b32.xlu0 %v582, 256
        %v585 = vpop.permute.xlu0 %584
        %v586 = vlaneseq
        %v587 = vshrl.u32 %v586, 7
        %v588 = vsub.s32 7, %v587
        %v589 = vrot.slane %v536, %v588
        %591 = vbcast.lane.b32.xlu0 %v589, 256
        %v592 = vpop.permute.xlu0 %591
        %v593 = vld [vmem:[#allocation3] sm:$0x1]
        %v595 = vlaneseq
        %v596 = vshrl.u32 %v595, 7
        %v597 = vsub.s32 0, %v596
        %v598 = vrot.slane %v593, %v597
        %v600 = vsub.f32 %v543, %v598
        %v601 = vsub.f32 %v550, %v598
        %v602 = vsub.f32 %v557, %v598
        %v603 = vsub.f32 %v564, %v598
        %v604 = vsub.f32 %v571, %v598
        %v605 = vsub.f32 %v578, %v598
        %v606 = vsub.f32 %v585, %v598
        %v607 = vsub.f32 %v592, %v598
        %v608 = vmul.f32 %v600, %v600
        %v609 = vmul.f32 %v601, %v601
        %v610 = vmul.f32 %v602, %v602
        %v611 = vmul.f32 %v603, %v603
        %v612 = vmul.f32 %v604, %v604
        %v613 = vmul.f32 %v605, %v605
        %v614 = vmul.f32 %v606, %v606
        %v615 = vmul.f32 %v607, %v607
        %v616 = vmul.f32 %v608, -0.5
        %v617 = vmul.f32 %v609, -0.5
        %v618 = vmul.f32 %v610, -0.5
        %v619 = vmul.f32 %v611, -0.5
        %v620 = vmul.f32 %v612, -0.5
        %v621 = vmul.f32 %v613, -0.5
        %v622 = vmul.f32 %v614, -0.5
        %v623 = vmul.f32 %v615, -0.5
        %v624 = vmul.f32 %v616, 1.442695
        %v625 = vpow.pop %v624
        %v626 = vmul.f32 %v617, 1.442695
        %v627 = vpow.pop %v626
        %v628 = vmul.f32 %v618, 1.442695
        %v629 = vpow.pop %v628
        %v630 = vmul.f32 %v619, 1.442695
        %v631 = vpow.pop %v630
        %v632 = vmul.f32 %v620, 1.442695
        %v633 = vpow.pop %v632
        %v634 = vmul.f32 %v621, 1.442695
        %v635 = vpow.pop %v634
        %v636 = vmul.f32 %v622, 1.442695
        %v637 = vpow.pop %v636
        %v638 = vmul.f32 %v623, 1.442695
        %v639 = vpow.pop %v638
        %vm640 = vcmask 523264
        %v641 = vsel %vm640, %v625, 0.0
        %v642 = vrot.slane %v641, 4
        %v643 = vadd.f32 %v641, %v642
        %v644 = vrot.slane %v643, 2
        %v645 = vadd.f32 %v643, %v644
        %v646 = vrot.slane %v645, 1
        %v647 = vadd.f32 %v645, %v646
        %v648 = vsel %vm640, %v627, 0.0
        %v649 = vrot.slane %v648, 4
        %v650 = vadd.f32 %v648, %v649
        %v651 = vrot.slane %v650, 2
        %v652 = vadd.f32 %v650, %v651
        %v653 = vrot.slane %v652, 1
        %v654 = vadd.f32 %v652, %v653
        %v655 = vsel %vm640, %v629, 0.0
        %v656 = vrot.slane %v655, 4
        %v657 = vadd.f32 %v655, %v656
        %v658 = vrot.slane %v657, 2
        %v659 = vadd.f32 %v657, %v658
        %v660 = vrot.slane %v659, 1
        %v661 = vadd.f32 %v659, %v660
        %v662 = vsel %vm640, %v631, 0.0
        %v663 = vrot.slane %v662, 4
        %v664 = vadd.f32 %v662, %v663
        %v665 = vrot.slane %v664, 2
        %v666 = vadd.f32 %v664, %v665
        %v667 = vrot.slane %v666, 1
        %v668 = vadd.f32 %v666, %v667
        %v669 = vsel %vm640, %v633, 0.0
        %v670 = vrot.slane %v669, 4
        %v671 = vadd.f32 %v669, %v670
        %v672 = vrot.slane %v671, 2
        %v673 = vadd.f32 %v671, %v672
        %v674 = vrot.slane %v673, 1
        %v675 = vadd.f32 %v673, %v674
        %v676 = vsel %vm640, %v635, 0.0
        %v677 = vrot.slane %v676, 4
        %v678 = vadd.f32 %v676, %v677
        %v679 = vrot.slane %v678, 2
        %v680 = vadd.f32 %v678, %v679
        %v681 = vrot.slane %v680, 1
        %v682 = vadd.f32 %v680, %v681
        %v683 = vsel %vm640, %v637, 0.0
        %v684 = vrot.slane %v683, 4
        %v685 = vadd.f32 %v683, %v684
        %v686 = vrot.slane %v685, 2
        %v687 = vadd.f32 %v685, %v686
        %v688 = vrot.slane %v687, 1
        %v689 = vadd.f32 %v687, %v688
        %v690 = vsel %vm640, %v639, 0.0
        %v691 = vrot.slane %v690, 4
        %v692 = vadd.f32 %v690, %v691
        %v693 = vrot.slane %v692, 2
        %v694 = vadd.f32 %v692, %v693
        %v695 = vrot.slane %v694, 1
        %v696 = vadd.f32 %v694, %v695
        %v697 = vadd.f32 %v647, 0.0
        %v698 = vadd.f32 %v654, 0.0
        %v699 = vadd.f32 %v661, 0.0
        %v700 = vadd.f32 %v668, 0.0
        %v701 = vadd.f32 %v675, 0.0
        %v702 = vadd.f32 %v682, 0.0
        %v703 = vadd.f32 %v689, 0.0
        %v704 = vadd.f32 %v696, 0.0
        %713 = vrot.lane.b32.xlu0 %v697, 120
        %v714 = vpop.permute.xlu0 %713
        %715 = vrot.lane.b32.xlu0 %v698, 120
        %v716 = vpop.permute.xlu0 %715
        %717 = vrot.lane.b32.xlu0 %v699, 120
        %v718 = vpop.permute.xlu0 %717
        %719 = vrot.lane.b32.xlu0 %v700, 120
        %v720 = vpop.permute.xlu0 %719
        %721 = vrot.lane.b32.xlu0 %v701, 120
        %v722 = vpop.permute.xlu0 %721
        %723 = vrot.lane.b32.xlu0 %v702, 120
        %v724 = vpop.permute.xlu0 %723
        %725 = vrot.lane.b32.xlu0 %v703, 120
        %v726 = vpop.permute.xlu0 %725
        %727 = vrot.lane.b32.xlu0 %v704, 120
        %v728 = vpop.permute.xlu0 %727
        %v737 = vadd.f32 %v697, %v714
        %v738 = vadd.f32 %v698, %v716
        %v739 = vadd.f32 %v699, %v718
        %v740 = vadd.f32 %v700, %v720
        %v741 = vadd.f32 %v701, %v722
        %v742 = vadd.f32 %v702, %v724
        %v743 = vadd.f32 %v703, %v726
        %v744 = vadd.f32 %v704, %v728
        %745 = vrot.lane.b32.xlu0 %v697, 112
        %v746 = vpop.permute.xlu0 %745
        %747 = vrot.lane.b32.xlu0 %v698, 112
        %v748 = vpop.permute.xlu0 %747
        %749 = vrot.lane.b32.xlu0 %v699, 112
        %v750 = vpop.permute.xlu0 %749
        %751 = vrot.lane.b32.xlu0 %v700, 112
        %v752 = vpop.permute.xlu0 %751
        %753 = vrot.lane.b32.xlu0 %v701, 112
        %v754 = vpop.permute.xlu0 %753
        %755 = vrot.lane.b32.xlu0 %v702, 112
        %v756 = vpop.permute.xlu0 %755
        %757 = vrot.lane.b32.xlu0 %v703, 112
        %v758 = vpop.permute.xlu0 %757
        %759 = vrot.lane.b32.xlu0 %v704, 112
        %v760 = vpop.permute.xlu0 %759
        %v769 = vadd.f32 %v737, %v746
        %v770 = vadd.f32 %v738, %v748
        %v771 = vadd.f32 %v739, %v750
        %v772 = vadd.f32 %v740, %v752
        %v773 = vadd.f32 %v741, %v754
        %v774 = vadd.f32 %v742, %v756
        %v775 = vadd.f32 %v743, %v758
        %v776 = vadd.f32 %v744, %v760
        %777 = vrot.lane.b32.xlu0 %v697, 104
        %v778 = vpop.permute.xlu0 %777
        %779 = vrot.lane.b32.xlu0 %v698, 104
        %v780 = vpop.permute.xlu0 %779
        %781 = vrot.lane.b32.xlu0 %v699, 104
        %v782 = vpop.permute.xlu0 %781
        %783 = vrot.lane.b32.xlu0 %v700, 104
        %v784 = vpop.permute.xlu0 %783
        %785 = vrot.lane.b32.xlu0 %v701, 104
        %v786 = vpop.permute.xlu0 %785
        %787 = vrot.lane.b32.xlu0 %v702, 104
        %v788 = vpop.permute.xlu0 %787
        %789 = vrot.lane.b32.xlu0 %v703, 104
        %v790 = vpop.permute.xlu0 %789
        %791 = vrot.lane.b32.xlu0 %v704, 104
        %v792 = vpop.permute.xlu0 %791
        %v801 = vadd.f32 %v769, %v778
        %v802 = vadd.f32 %v770, %v780
        %v803 = vadd.f32 %v771, %v782
        %v804 = vadd.f32 %v772, %v784
        %v805 = vadd.f32 %v773, %v786
        %v806 = vadd.f32 %v774, %v788
        %v807 = vadd.f32 %v775, %v790
        %v808 = vadd.f32 %v776, %v792
        %809 = vrot.lane.b32.xlu0 %v697, 96
        %v810 = vpop.permute.xlu0 %809
        %811 = vrot.lane.b32.xlu0 %v698, 96
        %v812 = vpop.permute.xlu0 %811
        %813 = vrot.lane.b32.xlu0 %v699, 96
        %v814 = vpop.permute.xlu0 %813
        %815 = vrot.lane.b32.xlu0 %v700, 96
        %v816 = vpop.permute.xlu0 %815
        %817 = vrot.lane.b32.xlu0 %v701, 96
        %v818 = vpop.permute.xlu0 %817
        %819 = vrot.lane.b32.xlu0 %v702, 96
        %v820 = vpop.permute.xlu0 %819
        %821 = vrot.lane.b32.xlu0 %v703, 96
        %v822 = vpop.permute.xlu0 %821
        %823 = vrot.lane.b32.xlu0 %v704, 96
        %v824 = vpop.permute.xlu0 %823
        %v833 = vadd.f32 %v801, %v810
        %v834 = vadd.f32 %v802, %v812
        %v835 = vadd.f32 %v803, %v814
        %v836 = vadd.f32 %v804, %v816
        %v837 = vadd.f32 %v805, %v818
        %v838 = vadd.f32 %v806, %v820
        %v839 = vadd.f32 %v807, %v822
        %v840 = vadd.f32 %v808, %v824
        %841 = vrot.lane.b32.xlu0 %v697, 88
        %v842 = vpop.permute.xlu0 %841
        %843 = vrot.lane.b32.xlu0 %v698, 88
        %v844 = vpop.permute.xlu0 %843
        %845 = vrot.lane.b32.xlu0 %v699, 88
        %v846 = vpop.permute.xlu0 %845
        %847 = vrot.lane.b32.xlu0 %v700, 88
        %v848 = vpop.permute.xlu0 %847
        %849 = vrot.lane.b32.xlu0 %v701, 88
        %v850 = vpop.permute.xlu0 %849
        %851 = vrot.lane.b32.xlu0 %v702, 88
        %v852 = vpop.permute.xlu0 %851
        %853 = vrot.lane.b32.xlu0 %v703, 88
        %v854 = vpop.permute.xlu0 %853
        %855 = vrot.lane.b32.xlu0 %v704, 88
        %v856 = vpop.permute.xlu0 %855
        %v865 = vadd.f32 %v833, %v842
        %v866 = vadd.f32 %v834, %v844
        %v867 = vadd.f32 %v835, %v846
        %v868 = vadd.f32 %v836, %v848
        %v869 = vadd.f32 %v837, %v850
        %v870 = vadd.f32 %v838, %v852
        %v871 = vadd.f32 %v839, %v854
        %v872 = vadd.f32 %v840, %v856
        %873 = vrot.lane.b32.xlu0 %v697, 80
        %v874 = vpop.permute.xlu0 %873
        %875 = vrot.lane.b32.xlu0 %v698, 80
        %v876 = vpop.permute.xlu0 %875
        %877 = vrot.lane.b32.xlu0 %v699, 80
        %v878 = vpop.permute.xlu0 %877
        %879 = vrot.lane.b32.xlu0 %v700, 80
        %v880 = vpop.permute.xlu0 %879
        %881 = vrot.lane.b32.xlu0 %v701, 80
        %v882 = vpop.permute.xlu0 %881
        %883 = vrot.lane.b32.xlu0 %v702, 80
        %v884 = vpop.permute.xlu0 %883
        %885 = vrot.lane.b32.xlu0 %v703, 80
        %v886 = vpop.permute.xlu0 %885
        %887 = vrot.lane.b32.xlu0 %v704, 80
        %v888 = vpop.permute.xlu0 %887
        %v897 = vadd.f32 %v865, %v874
        %v898 = vadd.f32 %v866, %v876
        %v899 = vadd.f32 %v867, %v878
        %v900 = vadd.f32 %v868, %v880
        %v901 = vadd.f32 %v869, %v882
        %v902 = vadd.f32 %v870, %v884
        %v903 = vadd.f32 %v871, %v886
        %v904 = vadd.f32 %v872, %v888
        %905 = vrot.lane.b32.xlu0 %v697, 72
        %v906 = vpop.permute.xlu0 %905
        %907 = vrot.lane.b32.xlu0 %v698, 72
        %v908 = vpop.permute.xlu0 %907
        %909 = vrot.lane.b32.xlu0 %v699, 72
        %v910 = vpop.permute.xlu0 %909
        %911 = vrot.lane.b32.xlu0 %v700, 72
        %v912 = vpop.permute.xlu0 %911
        %913 = vrot.lane.b32.xlu0 %v701, 72
        %v914 = vpop.permute.xlu0 %913
        %915 = vrot.lane.b32.xlu0 %v702, 72
        %v916 = vpop.permute.xlu0 %915
        %917 = vrot.lane.b32.xlu0 %v703, 72
        %v918 = vpop.permute.xlu0 %917
        %919 = vrot.lane.b32.xlu0 %v704, 72
        %v920 = vpop.permute.xlu0 %919
        %v929 = vadd.f32 %v897, %v906
        %v930 = vadd.f32 %v898, %v908
        %v931 = vadd.f32 %v899, %v910
        %v932 = vadd.f32 %v900, %v912
        %v933 = vadd.f32 %v901, %v914
        %v934 = vadd.f32 %v902, %v916
        %v935 = vadd.f32 %v903, %v918
        %v936 = vadd.f32 %v904, %v920
        %v937 = vmul.f32 %v929, 0.125
        %v938 = vmul.f32 %v930, 0.125
        %v939 = vmul.f32 %v931, 0.125
        %v940 = vmul.f32 %v932, 0.125
        %v941 = vmul.f32 %v933, 0.125
        %v942 = vmul.f32 %v934, 0.125
        %v943 = vmul.f32 %v935, 0.125
        %v944 = vmul.f32 %v936, 0.125
        %v953 = vrot.slane %v938, 7
        %vm954 = vcmask 1041409
        %v955 = vsel %vm954, %v953, %v937
        %v956 = vrot.slane %v939, 6
        %vm957 = vcmask 1042434
        %v958 = vsel %vm957, %v956, %v955
        %v959 = vrot.slane %v940, 5
        %vm960 = vcmask 1043459
        %v961 = vsel %vm960, %v959, %v958
        %v962 = vrot.slane %v941, 4
        %vm963 = vcmask 1044484
        %v964 = vsel %vm963, %v962, %v961
        %v965 = vrot.slane %v942, 3
        %vm966 = vcmask 1045509
        %v967 = vsel %vm966, %v965, %v964
        %v968 = vrot.slane %v943, 2
        %vm969 = vcmask 1046534
        %v970 = vsel %vm969, %v968, %v967
        %v971 = vrot.slane %v944, 1
        %vm972 = vcmask 1047559
        %v973 = vsel %vm972, %v971, %v970
        %v975 = vsel %vm432, %v973, -inf
        %976 = vmax.xlane.f32.xlu0 %v975
        %v977 = vpop.xlane.xlu0 %976
        %v979 = vrot.slane %v977, 1
        %v980 = vrot.slane %v977, 2
        %v981 = vrot.slane %v977, 3
        %v982 = vrot.slane %v977, 4
        %v983 = vrot.slane %v977, 5
        %v984 = vrot.slane %v977, 6
        %v985 = vrot.slane %v977, 7
        %v994 = vsub.f32 %v937, %v977
        %v995 = vsub.f32 %v938, %v979
        %v996 = vsub.f32 %v939, %v980
        %v997 = vsub.f32 %v940, %v981
        %v998 = vsub.f32 %v941, %v982
        %v999 = vsub.f32 %v942, %v983
        %v1000 = vsub.f32 %v943, %v984
        %v1001 = vsub.f32 %v944, %v985
        %v1002 = vmul.f32 %v994, 1.442695
        %v1003 = vpow.pop %v1002
        %v1004 = vmul.f32 %v995, 1.442695
        %v1005 = vpow.pop %v1004
        %v1006 = vmul.f32 %v996, 1.442695
        %v1007 = vpow.pop %v1006
        %v1008 = vmul.f32 %v997, 1.442695
        %v1009 = vpow.pop %v1008
        %v1010 = vmul.f32 %v998, 1.442695
        %v1011 = vpow.pop %v1010
        %v1012 = vmul.f32 %v999, 1.442695
        %v1013 = vpow.pop %v1012
        %v1014 = vmul.f32 %v1000, 1.442695
        %v1015 = vpow.pop %v1014
        %v1016 = vmul.f32 %v1001, 1.442695
        %v1017 = vpow.pop %v1016
        %v1026 = vrot.slane %v1005, 7
        %v1027 = vsel %vm954, %v1026, %v1003
        %v1028 = vrot.slane %v1007, 6
        %v1029 = vsel %vm957, %v1028, %v1027
        %v1030 = vrot.slane %v1009, 5
        %v1031 = vsel %vm960, %v1030, %v1029
        %v1032 = vrot.slane %v1011, 4
        %v1033 = vsel %vm963, %v1032, %v1031
        %v1034 = vrot.slane %v1013, 3
        %v1035 = vsel %vm966, %v1034, %v1033
        %v1036 = vrot.slane %v1015, 2
        %v1037 = vsel %vm969, %v1036, %v1035
        %v1038 = vrot.slane %v1017, 1
        %v1039 = vsel %vm972, %v1038, %v1037
        %v1041 = vsel %vm432, %v1039, 0.0
        %1042 = vadd.xlane.f32.xlu0 %v1041
        %v1043 = vpop.xlane.xlu0 %1042
        %v1044 = vrcp.pop %v1043
        %v1046 = vrot.slane %v1044, 1
        %v1047 = vrot.slane %v1044, 2
        %v1048 = vrot.slane %v1044, 3
        %v1049 = vrot.slane %v1044, 4
        %v1050 = vrot.slane %v1044, 5
        %v1051 = vrot.slane %v1044, 6
        %v1052 = vrot.slane %v1044, 7
        %v1061 = vmul.f32 %v1003, %v1044
        %v1062 = vmul.f32 %v1005, %v1046
        %v1063 = vmul.f32 %v1007, %v1047
        %v1064 = vmul.f32 %v1009, %v1048
        %v1065 = vmul.f32 %v1011, %v1049
        %v1066 = vmul.f32 %v1013, %v1050
        %v1067 = vmul.f32 %v1015, %v1051
        %v1068 = vmul.f32 %v1017, %v1052
        %v1077 = vrot.slane %v1062, 7
        %v1078 = vsel %vm954, %v1077, %v1061
        %v1079 = vrot.slane %v1063, 6
        %v1080 = vsel %vm957, %v1079, %v1078
        %v1081 = vrot.slane %v1064, 5
        %v1082 = vsel %vm960, %v1081, %v1080
        %v1083 = vrot.slane %v1065, 4
        %v1084 = vsel %vm963, %v1083, %v1082
        %v1085 = vrot.slane %v1066, 3
        %v1086 = vsel %vm966, %v1085, %v1084
        %v1087 = vrot.slane %v1067, 2
        %v1088 = vsel %vm969, %v1087, %v1086
        %v1089 = vrot.slane %v1068, 1
        %v1090 = vsel %vm972, %v1089, %v1088
        %v1091 = vsel %vm432, %v1090, 0
        %1093 = vmatprep.subr.mxu0 0.0
        %1094 = vmatpush1.msra.mxu0 %v462
        %1095 = vmatprep.subr.mxu0 0.0
        %1096 = vmatpush1.msra.mxu0 0.0
        %1097 = vmatprep.subr.mxu0 0.0
        %1098 = vmatpush1.msra.mxu0 0.0
        %1099 = vmatprep.subr.mxu0 0.0
        %1100 = vmatpush1.msra.mxu0 0.0
        %1101 = vmatprep.subr.mxu0 0.0
        %1102 = vmatpush1.msra.mxu0 0.0
        %1103 = vmatprep.subr.mxu0 0.0
        %1104 = vmatpush1.msra.mxu0 0.0
        %1105 = vmatprep.subr.mxu0 0.0
        %1106 = vmatpush1.msra.mxu0 0.0
        %1107 = vmatprep.subr.mxu0 0.0
        %1108 = vmatpush1.msra.mxu0 0.0
        %1109 = vmatprep.subr.mxu0 0.0
        %1110 = vmatpush1.msra.mxu0 0.0
        %1111 = vmatprep.subr.mxu0 0.0
        %1112 = vmatpush1.msra.mxu0 0.0
        %1113 = vmatprep.subr.mxu0 0.0
        %1114 = vmatpush1.msra.mxu0 0.0
        %1115 = vmatprep.subr.mxu0 0.0
        %1116 = vmatpush1.msra.mxu0 0.0
        %1117 = vmatprep.subr.mxu0 0.0
        %1118 = vmatpush1.msra.mxu0 0.0
        %1119 = vmatprep.subr.mxu0 0.0
        %1120 = vmatpush1.msra.mxu0 0.0
        %1121 = vmatprep.subr.mxu0 0.0
        %1122 = vmatpush1.msra.mxu0 0.0
        %1123 = vmatprep.subr.mxu0 0.0
        %1124 = vmatpush1.msra.mxu0 0.0
        %1125 = vmatprep.subr.mxu0 0.0
        %1126 = vmatpush1.msra.mxu0 0.0
        %1127 = vmatprep.subr.mxu0 0.0
        %1128 = vmatpush1.msra.mxu0 0.0
        %1129 = vmatprep.subr.mxu0 0.0
        %1130 = vmatpush1.msra.mxu0 0.0
        %1131 = vmatprep.subr.mxu0 0.0
        %1132 = vmatpush1.msra.mxu0 0.0
        %1133 = vmatprep.subr.mxu0 0.0
        %1134 = vmatpush1.msra.mxu0 0.0
        %1135 = vmatprep.subr.mxu0 0.0
        %1136 = vmatpush1.msra.mxu0 0.0
        %1137 = vmatprep.subr.mxu0 0.0
        %1138 = vmatpush1.msra.mxu0 0.0
        %1139 = vmatprep.subr.mxu0 0.0
        %1140 = vmatpush1.msra.mxu0 0.0
        %1141 = vmatprep.subr.mxu0 0.0
        %1142 = vmatpush1.msra.mxu0 0.0
        %1143 = vmatprep.subr.mxu0 0.0
        %1144 = vmatpush1.msra.mxu0 0.0
        %1145 = vmatprep.subr.mxu0 0.0
        %1146 = vmatpush1.msra.mxu0 0.0
        %1147 = vmatprep.subr.mxu0 0.0
        %1148 = vmatpush1.msra.mxu0 0.0
        %1149 = vmatprep.subr.mxu0 0.0
        %1150 = vmatpush1.msra.mxu0 0.0
        %1151 = vmatprep.subr.mxu0 0.0
        %1152 = vmatpush1.msra.mxu0 0.0
        %1153 = vmatprep.subr.mxu0 0.0
        %1154 = vmatpush1.msra.mxu0 0.0
        %1155 = vmatprep.subr.mxu0 0.0
        %1156 = vmatpush1.msra.mxu0 0.0
        %1157 = vmatprep.mubr.f32.mxu0 0.0
        %1158 = vmatmul.mubr.f32.gmra.mrb[0].mxu0 %v1091
        %v1159 = vpop.f32.mrb[0].mxu0
        %v1160 = vadd.f32 0.0, %v1159
        %v1161 = vpop.f32.mrb[0].mxu0
        %1162 = vdwg.mxu0
        %p1163 = scmp.eq.s32.totalorder %s28, 0
        // Predicated region
        $region49: #{tpu_custom_call.1} parent=47 // pred_check
          %p1164 = pneg %p1163
        $region50: #{tpu_custom_call.1} parent=47 // pred_check_branch
          %1166 = sbr.rel (%p1164) target = $region52
        $region51: #{tpu_custom_call.1} parent=47 // pred_region
          %1167 = vst.msk [vmem:[%s329] sm:$0xff] %vm358, 0.0
        $region52: #{tpu_custom_call.1} parent=47 // pred_fallthru
          _
        %v1168 = vld [vmem:[%s329] sm:$0xff]
        %v1169 = vld [vmem:[%s345] sm:$0xff]
        %v1171 = vsel %vm432, %v1160, 0
        %1173 = vmatprep.subr.mxu0 0.0
        %1174 = vmatpush1.msra.mxu0 %v1169
        %1175 = vmatprep.subr.mxu0 0.0
        %1176 = vmatpush1.msra.mxu0 0.0
        %1177 = vmatprep.subr.mxu0 0.0
        %1178 = vmatpush1.msra.mxu0 0.0
        %1179 = vmatprep.subr.mxu0 0.0
        %1180 = vmatpush1.msra.mxu0 0.0
        %1181 = vmatprep.subr.mxu0 0.0
        %1182 = vmatpush1.msra.mxu0 0.0
        %1183 = vmatprep.subr.mxu0 0.0
        %1184 = vmatpush1.msra.mxu0 0.0
        %1185 = vmatprep.subr.mxu0 0.0
        %1186 = vmatpush1.msra.mxu0 0.0
        %1187 = vmatprep.subr.mxu0 0.0
        %1188 = vmatpush1.msra.mxu0 0.0
        %1189 = vmatprep.subr.mxu0 0.0
        %1190 = vmatpush1.msra.mxu0 0.0
        %1191 = vmatprep.subr.mxu0 0.0
        %1192 = vmatpush1.msra.mxu0 0.0
        %1193 = vmatprep.subr.mxu0 0.0
        %1194 = vmatpush1.msra.mxu0 0.0
        %1195 = vmatprep.subr.mxu0 0.0
        %1196 = vmatpush1.msra.mxu0 0.0
        %1197 = vmatprep.subr.mxu0 0.0
        %1198 = vmatpush1.msra.mxu0 0.0
        %1199 = vmatprep.subr.mxu0 0.0
        %1200 = vmatpush1.msra.mxu0 0.0
        %1201 = vmatprep.subr.mxu0 0.0
        %1202 = vmatpush1.msra.mxu0 0.0
        %1203 = vmatprep.subr.mxu0 0.0
        %1204 = vmatpush1.msra.mxu0 0.0
        %1205 = vmatprep.subr.mxu0 0.0
        %1206 = vmatpush1.msra.mxu0 0.0
        %1207 = vmatprep.subr.mxu0 0.0
        %1208 = vmatpush1.msra.mxu0 0.0
        %1209 = vmatprep.subr.mxu0 0.0
        %1210 = vmatpush1.msra.mxu0 0.0
        %1211 = vmatprep.subr.mxu0 0.0
        %1212 = vmatpush1.msra.mxu0 0.0
        %1213 = vmatprep.subr.mxu0 0.0
        %1214 = vmatpush1.msra.mxu0 0.0
        %1215 = vmatprep.subr.mxu0 0.0
        %1216 = vmatpush1.msra.mxu0 0.0
        %1217 = vmatprep.subr.mxu0 0.0
        %1218 = vmatpush1.msra.mxu0 0.0
        %1219 = vmatprep.subr.mxu0 0.0
        %1220 = vmatpush1.msra.mxu0 0.0
        %1221 = vmatprep.subr.mxu0 0.0
        %1222 = vmatpush1.msra.mxu0 0.0
        %1223 = vmatprep.subr.mxu0 0.0
        %1224 = vmatpush1.msra.mxu0 0.0
        %1225 = vmatprep.subr.mxu0 0.0
        %1226 = vmatpush1.msra.mxu0 0.0
        %1227 = vmatprep.subr.mxu0 0.0
        %1228 = vmatpush1.msra.mxu0 0.0
        %1229 = vmatprep.subr.mxu0 0.0
        %1230 = vmatpush1.msra.mxu0 0.0
        %1231 = vmatprep.subr.mxu0 0.0
        %1232 = vmatpush1.msra.mxu0 0.0
        %1233 = vmatprep.subr.mxu0 0.0
        %1234 = vmatpush1.msra.mxu0 0.0
        %1235 = vmatprep.subr.mxu0 0.0
        %1236 = vmatpush1.msra.mxu0 0.0
        %1237 = vmatprep.mubr.f32.mxu0 0.0
        %1238 = vmatmul.mubr.f32.gmra.mrb[0].mxu0 %v1171
        %v1239 = vpop.f32.mrb[0].mxu0
        %v1240 = vadd.f32 0.0, %v1239
        %v1241 = vpop.f32.mrb[0].mxu0
        %1242 = vdwg.mxu0
        %v1243 = vadd.f32 %v1168, %v1240
        %1244 = vst.msk [vmem:[%s329] sm:$0xff] %vm358, %v1243
        %p1245 = scmp.eq.s32.totalorder %s28, 3
        // Predicated region
        $region53: #{tpu_custom_call.1} parent=47 // pred_check
          %p1246 = pneg %p1245
        $region54: #{tpu_custom_call.1} parent=47 // pred_check_branch
          %1248 = sbr.rel (%p1246) target = $region56
        $region55: #{tpu_custom_call.1} parent=47 // pred_region
          %v1249 = vld [vmem:[%s329] sm:$0xff]
          %v1250 = vld [vmem:[%s6] sm:$0x1]
          %v1252 = vlaneseq
          %v1253 = vshrl.u32 %v1252, 7
          %v1254 = vsub.s32 0, %v1253
          %v1255 = vrot.slane %v1250, %v1254
          %v1257 = vadd.f32 %v1249, %v1255
          %1258 = vst.msk [vmem:[%s329] sm:$0xff] %vm358, %v1257
        $region56: #{tpu_custom_call.1} parent=47 // pred_fallthru
          _
        %s1259 = sand.u32 %s217, 1
        %s1260 = scalar_lea.sflag [#allocation5], %s1259
        %s1261 = sand.u32 %s217, 1
        %s1262 = smul.addr %s1261, 8
        %s1263 = scalar_lea.vmem [#allocation4], %s1262
        // Predicated region
        $region57: #{tpu_custom_call.1} parent=47 // pred_check
          %p1264 = pneg %p227
        $region58: #{tpu_custom_call.1} parent=47 // pred_check_branch
          %1266 = sbr.rel (%p1264) target = $region60
        $region59: #{tpu_custom_call.1} parent=47 // pred_region
          %s1268 = ssub.s32 128, 128
          %1269 = vsyncadd %s1260, %s1268
          %s1270 = sadd.s32 %s27, %s26
          %s1271 = smul.addr %s1270, 128
          %s1272 = scalar_lea.hbm %s7, %s1271
          %s1274 = sshll.u32 %s1263, 4
          %s1275 = int_to_ptr.vmem [resolvable:$true] %s1274
          %1277 = dma.vmem_to_hbm [thread:$0]  %s1275, 128, %s1272, %s1260
        $region60: #{tpu_custom_call.1} parent=47 // pred_fallthru
          _
      $region48: #{tpu_custom_call.1} parent=5 // pred_fallthru
        _
      %p1278 = scmp.le.s32.totalorder 2, %s16
      // Predicated region
      $region61: #{tpu_custom_call.1} parent=5 // pred_check
        %p1279 = pneg %p1278
      $region62: #{tpu_custom_call.1} parent=5 // pred_check_branch
        %1281 = sbr.rel (%p1279) target = $region64
      $region63: #{tpu_custom_call.1} parent=5 // pred_region
        %s1282 = ssub.s32 %s16, 2
        // Predicated region
        $region65: #{tpu_custom_call.1} parent=63 // pred_check
          %p1283 = pneg %p233
        $region66: #{tpu_custom_call.1} parent=63 // pred_check_branch
          %1285 = sbr.rel (%p1283) target = $region68
        $region67: #{tpu_custom_call.1} parent=63 // pred_region
          %s1286 = sand.u32 %s218, 1
          %s1287 = scalar_lea.sflag [#allocation5], %s1286
          %s1288 = sand.u32 %s218, 1
          %s1289 = smul.addr %s1288, 8
          %s1290 = scalar_lea.vmem [#allocation4], %s1289
          %1291 = dma.done %s1287, 128
        $region68: #{tpu_custom_call.1} parent=63 // pred_fallthru
          _
      $region64: #{tpu_custom_call.1} parent=5 // pred_fallthru
        _
    $region6: #{tpu_custom_call.1} parent=1 // loop_footer
      %s20 = sadd.s32 1, %s16
    $region7: #{tpu_custom_call.1} parent=1 // loop_footer_branch
      %15 = sbr.rel target = $region3
    $region8: #{tpu_custom_call.1} parent=1 // loop_exit
      _
    %1292 = vsyncpa [#allocation5], 1
    %s1293 = scalar_lea.sflag [#allocation5], 1
    %1294 = vsyncpa %s1293, 1

</llo_original>
